<compile_context>
chip_gen: v7x
topology: tpu7x:2x2x1
jax: 0.10.0
libtpu: 0.0.40
codegen_flags: <defaults>
</compile_context>

<pallas_src>
import jax
import jax.numpy as jnp
from jax import lax
from jax.experimental import pallas as pl
from jax.experimental.pallas import tpu as pltpu

K = 7          # conv kernel size
P = K // 2     # padding


def spatial_attention_kernel(b_ref, m_ref, x_ref, o_ref, pad_avg_ref, pad_max_ref):
    # b_ref      : SMEM f32[1]                       conv bias
    # m_ref      : VMEM f32[2, K, W, W]              banded weight matrices
    # x_ref      : VMEM f32[Bt, C, H, W]             input block
    # o_ref      : VMEM f32[Bt, H, W]                output block
    # pad_*_ref  : VMEM f32[Bt, H+2P, W]             row-zero-padded avg/max planes
    Bt, C, H, W = x_ref.shape

    x = x_ref[...]                                   # (Bt, C, H, W)
    avg = jnp.mean(x, axis=1)                        # (Bt, H, W)
    mx = jnp.max(x, axis=1)                          # (Bt, H, W)

    # Row-zero-padded planes via scratch: zero everything (cheap, a few vregs),
    # then write the interior lane-aligned.  Borders stay exactly zero =>
    # zero-padding along H with no per-tap boundary masks.  (Zeroed every step:
    # with a "parallel" batch axis each TensorCore runs its own grid slice, so
    # a one-shot program_id==0 init would be skipped on the second core.)
    pad_avg_ref[...] = jnp.zeros_like(pad_avg_ref)
    pad_max_ref[...] = jnp.zeros_like(pad_max_ref)
    pad_avg_ref[:, P:P + H, :] = avg
    pad_max_ref[:, P:P + H, :] = mx

    # 14 small MXU matmuls: for each (plane, kh), a row-shifted (Bt, H, W) slab
    # contracted against a (W, W) banded matrix that encodes all kw taps plus
    # the zero-padding along W.  All stencil FLOPs ride the MXU; the VPU only
    # does the channel reduction, 14 adds and the final sigmoid.
    acc = jnp.full((Bt, H, W), b_ref[0], dtype=jnp.float32)
    for c, pref in enumerate((pad_avg_ref, pad_max_ref)):   # 0 = avg, 1 = max
        for kh in range(K):
            s = pref[:, kh:kh + H, :]                        # (Bt, H, W)
            mb = jnp.broadcast_to(m_ref[c, kh], (Bt, W, W))  # (Bt, W, W)
            acc = acc + jnp.einsum('bhj,bjw->bhw', s, mb,
                                   preferred_element_type=jnp.float32)

    o_ref[...] = jax.nn.sigmoid(acc)


def _banded_weight_matrices(w, width):
    """w: (1, 2, K, K) conv weight (OIHW) -> (2, K, W, W) banded matrices.

    M[c, kh, j, wo] = w[0, c, kh, j - wo + P] when that tap index lies in
    [0, K), else 0.  Contracting a row of the (row-shifted) plane against
    M[c, kh] performs all kw taps AND the zero-padding along W at once.
    """
    jj = jnp.arange(width)[:, None]
    ww = jnp.arange(width)[None, :]
    kw_idx = jj - ww + P                              # (W, W)
    valid = (kw_idx >= 0) & (kw_idx < K)
    kw_safe = jnp.clip(kw_idx, 0, K - 1)
    taps = w[0].astype(jnp.float32)[:, :, kw_safe]    # (2, K, W, W)
    return jnp.where(valid[None, None, :, :], taps, 0.0)


def _choose_bt(B, C, H, W, target_bytes=512 * 1024):
    """Batch elements per grid step: blocks big enough to amortize per-step
    overhead, but keep >= 2 grid steps (megacore) and evenly divide B."""
    per_item = C * H * W * 4
    bt = max(1, min(B, max(1, target_bytes // max(per_item, 1))))
    if B >= 2:
        bt = min(bt, B // 2)          # keep at least 2 grid steps
    bt = max(bt, 1)
    while B % bt != 0:                # kernel assumes an exact batch split
        bt -= 1
    return bt


def spatial_attention(x, w, b, *, bt=None):
    """x: (B, C, H, W) f32; w: (1, 2, K, K) f32; b: (1,) f32 -> (B, 1, H, W) f32."""
    B, C, H, W = x.shape
    if bt is None:
        bt = _choose_bt(B, C, H, W)
    assert B % bt == 0

    m = _banded_weight_matrices(w, W)               # (2, K, W, W)
    b_flat = b.reshape(-1).astype(jnp.float32)      # (1,)
    Hp = H + 2 * P

    # Explicit VMEM budget: double-buffered in/out blocks + resident weight
    # matrices + padded scratch, plus margin.  Raised above v5e's 16 MiB
    # default scoped VMEM when needed, capped well below v7x's 64 MiB.
    in_block = bt * C * H * W * 4
    out_block = bt * H * W * 4
    m_bytes = 2 * K * W * W * 4
    scratch_bytes = 2 * bt * Hp * W * 4
    need = 2 * (in_block + out_block + m_bytes) + scratch_bytes + (2 << 20)
    vmem_limit = int(min(max(need, 8 * 1024 * 1024), 48 * 1024 * 1024))

    out = pl.pallas_call(
        spatial_attention_kernel,
        out_shape=jax.ShapeDtypeStruct((B, H, W), jnp.float32),
        grid=(B // bt,),
        in_specs=[
            pl.BlockSpec(memory_space=pltpu.MemorySpace.SMEM),        # bias
            pl.BlockSpec((2, K, W, W), lambda i: (0, 0, 0, 0)),       # banded weights
            pl.BlockSpec((bt, C, H, W), lambda i: (i, 0, 0, 0)),      # x block
        ],
        out_specs=pl.BlockSpec((bt, H, W), lambda i: (i, 0, 0)),
        scratch_shapes=[
            pltpu.VMEM((bt, Hp, W), jnp.float32),   # row-padded avg plane
            pltpu.VMEM((bt, Hp, W), jnp.float32),   # row-padded max plane
        ],
        compiler_params=pltpu.CompilerParams(
            dimension_semantics=("parallel",),
            vmem_limit_bytes=vmem_limit),
    )(b_flat, m, x)

    return out.reshape(B, 1, H, W)


def reference_forward(x, w, b):
    avg = jnp.mean(x, axis=1, keepdims=True)
    mx = jnp.max(x, axis=1, keepdims=True)
    cat = jnp.concatenate([avg, mx], axis=1)
    out = lax.conv_general_dilated(
        cat, w, window_strides=(1, 1), padding=((P, P), (P, P)),
        dimension_numbers=("NCHW", "OIHW", "NCHW"))
    return jax.nn.sigmoid(out + b.reshape(1, 1, 1, 1))


if __name__ == "__main__":
    key = jax.random.PRNGKey(0)
    kx, kw, kb = jax.random.split(key, 3)

    B, C, H, W = 2, 4, 16, 16
    x = jax.random.normal(kx, (B, C, H, W), dtype=jnp.float32)

    # Deterministic synthetic parameters (Conv2d(2, 1, 7): weight (1,2,7,7), bias (1,))
    fan_in = 2 * K * K
    bound = 1.0 / (fan_in ** 0.5)
    w = jax.random.uniform(kw, (1, 2, K, K), jnp.float32, -bound, bound)
    b = jax.random.uniform(kb, (1,), jnp.float32, -bound, bound)

    out = spatial_attention(x, w, b)
    out = jax.block_until_ready(out)

    ref = jax.block_until_ready(reference_forward(x, w, b))
    assert out.shape == (B, 1, H, W)
    assert jnp.allclose(out, ref, atol=1e-4, rtol=1e-4), (
        f"max err = {jnp.max(jnp.abs(out - ref))}")

    print("KERNEL_OK")
</pallas_src>

<mosaic_0001>
module attributes {stable_mosaic.version = 11 : i64} {
  func.func @spatial_attention_kernel(%arg0: i32, %arg1: memref<1xf32, #tpu.memory_space<smem>>, %arg2: memref<2x7x16x16xf32, #tpu.memory_space<vmem>>, %arg3: memref<1x4x16x16xf32, #tpu.memory_space<vmem>>, %arg4: memref<1x16x16xf32, #tpu.memory_space<vmem>>, %arg5: memref<1x22x16xf32, #tpu.memory_space<vmem>>, %arg6: memref<1x22x16xf32, #tpu.memory_space<vmem>>) attributes {dimension_semantics = [#tpu.dimension_semantics<parallel>], iteration_bounds = array<i64: 2>, scalar_prefetch = 0 : i64, scratch_operands = 2 : i64, tpu.core_type = #tpu.core_type<tc>, window_params = [{transform_indices = @transform_0, window_bounds = array<i64: 1>}, {pipeline_mode = #tpu.pipeline_mode<synchronous>, transform_indices = @transform_1, window_bounds = array<i64: 2, 7, 16, 16>}, {transform_indices = @transform_2, window_bounds = array<i64: 1, 4, 16, 16>}, {transform_indices = @transform_3, window_bounds = array<i64: 1, 16, 16>}]} {
    %c0 = arith.constant 0 : index
    %c0_0 = arith.constant 0 : index
    %c0_1 = arith.constant 0 : index
    %c0_2 = arith.constant 0 : index
    %0 = vector.load %arg3[%c0, %c0_0, %c0_1, %c0_2] : memref<1x4x16x16xf32, #tpu.memory_space<vmem>>, vector<1x4x16x16xf32>
    %cst = arith.constant dense<0.000000e+00> : vector<1x16x16xf32>
    %1 = vector.multi_reduction <add>, %0, %cst [1] : vector<1x4x16x16xf32> to vector<1x16x16xf32>
    %cst_3 = arith.constant 4.000000e+00 : f32
    %2 = vector.broadcast %cst_3 : f32 to vector<1x16x16xf32>
    %3 = arith.divf %1, %2 : vector<1x16x16xf32>
    %cst_4 = arith.constant dense<0xFF800000> : vector<1x16x16xf32>
    %4 = vector.multi_reduction <maximumf>, %0, %cst_4 [1] : vector<1x4x16x16xf32> to vector<1x16x16xf32>
    %cst_5 = arith.constant 0.000000e+00 : f32
    %5 = vector.broadcast %cst_5 : f32 to vector<1x22x16xf32>
    %c0_6 = arith.constant 0 : index
    %c0_7 = arith.constant 0 : index
    %c0_8 = arith.constant 0 : index
    %6 = vector.load %arg5[%c0_6, %c0_7, %c0_8] : memref<1x22x16xf32, #tpu.memory_space<vmem>>, vector<1x22x16xf32>
    tpu.vector_store %arg5[%c0_6, %c0_7, %c0_8], %5 {strides = array<i32>} : memref<1x22x16xf32, #tpu.memory_space<vmem>>, vector<1x22x16xf32>,
    %cst_9 = arith.constant 0.000000e+00 : f32
    %7 = vector.broadcast %cst_9 : f32 to vector<1x22x16xf32>
    %c0_10 = arith.constant 0 : index
    %c0_11 = arith.constant 0 : index
    %c0_12 = arith.constant 0 : index
    %8 = vector.load %arg6[%c0_10, %c0_11, %c0_12] : memref<1x22x16xf32, #tpu.memory_space<vmem>>, vector<1x22x16xf32>
    tpu.vector_store %arg6[%c0_10, %c0_11, %c0_12], %7 {strides = array<i32>} : memref<1x22x16xf32, #tpu.memory_space<vmem>>, vector<1x22x16xf32>,
    %c0_13 = arith.constant 0 : index
    %c3 = arith.constant 3 : index
    %c0_14 = arith.constant 0 : index
    %9 = vector.load %arg5[%c0_13, %c3, %c0_14] : memref<1x22x16xf32, #tpu.memory_space<vmem>>, vector<1x16x16xf32>
    tpu.vector_store %arg5[%c0_13, %c3, %c0_14], %3 {strides = array<i32>} : memref<1x22x16xf32, #tpu.memory_space<vmem>>, vector<1x16x16xf32>,
    %c0_15 = arith.constant 0 : index
    %c3_16 = arith.constant 3 : index
    %c0_17 = arith.constant 0 : index
    %10 = vector.load %arg6[%c0_15, %c3_16, %c0_17] : memref<1x22x16xf32, #tpu.memory_space<vmem>>, vector<1x16x16xf32>
    tpu.vector_store %arg6[%c0_15, %c3_16, %c0_17], %4 {strides = array<i32>} : memref<1x22x16xf32, #tpu.memory_space<vmem>>, vector<1x16x16xf32>,
    %c0_18 = arith.constant 0 : index
    %11 = memref.load %arg1[%c0_18] : memref<1xf32, #tpu.memory_space<smem>>
    %12 = vector.broadcast %11 : f32 to vector<1x16x16xf32>
    %c0_19 = arith.constant 0 : index
    %c0_20 = arith.constant 0 : index
    %c0_21 = arith.constant 0 : index
    %13 = vector.load %arg5[%c0_19, %c0_20, %c0_21] : memref<1x22x16xf32, #tpu.memory_space<vmem>>, vector<1x16x16xf32>
    %c0_22 = arith.constant 0 : index
    %c0_23 = arith.constant 0 : index
    %c0_24 = arith.constant 0 : index
    %c0_25 = arith.constant 0 : index
    %14 = vector.load %arg2[%c0_22, %c0_23, %c0_24, %c0_25] : memref<2x7x16x16xf32, #tpu.memory_space<vmem>>, vector<1x1x16x16xf32>
    %15 = vector.shape_cast %14 : vector<1x1x16x16xf32> to vector<16x16xf32>
    %16 = vector.shape_cast %15 : vector<16x16xf32> to vector<1x16x16xf32>
    "tpu.trace_start"() <{level = 10 : i32, message = "bhj,bjw->bhw"}> : () -> ()
    %cst_26 = arith.constant dense<0.000000e+00> : vector<1x16x16xf32>
    %17 = tpu.matmul %13, %16, %cst_26 {dimension_numbers = #tpu.dot_dimension_numbers<[2], [1], [1], [2], [0, 0, 0, 1, 1, 2], [0], [0]>} : vector<1x16x16xf32>, vector<1x16x16xf32>, vector<1x16x16xf32> -> vector<1x16x16xf32>
    "tpu.trace_stop"() : () -> ()
    %18 = arith.addf %12, %17 : vector<1x16x16xf32>
    %c0_27 = arith.constant 0 : index
    %c1 = arith.constant 1 : index
    %c0_28 = arith.constant 0 : index
    %19 = vector.load %arg5[%c0_27, %c1, %c0_28] : memref<1x22x16xf32, #tpu.memory_space<vmem>>, vector<1x16x16xf32>
    %c0_29 = arith.constant 0 : index
    %c1_30 = arith.constant 1 : index
    %c0_31 = arith.constant 0 : index
    %c0_32 = arith.constant 0 : index
    %20 = vector.load %arg2[%c0_29, %c1_30, %c0_31, %c0_32] : memref<2x7x16x16xf32, #tpu.memory_space<vmem>>, vector<1x1x16x16xf32>
    %21 = vector.shape_cast %20 : vector<1x1x16x16xf32> to vector<16x16xf32>
    %22 = vector.shape_cast %21 : vector<16x16xf32> to vector<1x16x16xf32>
    "tpu.trace_start"() <{level = 10 : i32, message = "bhj,bjw->bhw"}> : () -> ()
    %cst_33 = arith.constant dense<0.000000e+00> : vector<1x16x16xf32>
    %23 = tpu.matmul %19, %22, %cst_33 {dimension_numbers = #tpu.dot_dimension_numbers<[2], [1], [1], [2], [0, 0, 0, 1, 1, 2], [0], [0]>} : vector<1x16x16xf32>, vector<1x16x16xf32>, vector<1x16x16xf32> -> vector<1x16x16xf32>
    "tpu.trace_stop"() : () -> ()
    %24 = arith.addf %18, %23 : vector<1x16x16xf32>
    %c0_34 = arith.constant 0 : index
    %c2 = arith.constant 2 : index
    %c0_35 = arith.constant 0 : index
    %25 = vector.load %arg5[%c0_34, %c2, %c0_35] : memref<1x22x16xf32, #tpu.memory_space<vmem>>, vector<1x16x16xf32>
    %c0_36 = arith.constant 0 : index
    %c2_37 = arith.constant 2 : index
    %c0_38 = arith.constant 0 : index
    %c0_39 = arith.constant 0 : index
    %26 = vector.load %arg2[%c0_36, %c2_37, %c0_38, %c0_39] : memref<2x7x16x16xf32, #tpu.memory_space<vmem>>, vector<1x1x16x16xf32>
    %27 = vector.shape_cast %26 : vector<1x1x16x16xf32> to vector<16x16xf32>
    %28 = vector.shape_cast %27 : vector<16x16xf32> to vector<1x16x16xf32>
    "tpu.trace_start"() <{level = 10 : i32, message = "bhj,bjw->bhw"}> : () -> ()
    %cst_40 = arith.constant dense<0.000000e+00> : vector<1x16x16xf32>
    %29 = tpu.matmul %25, %28, %cst_40 {dimension_numbers = #tpu.dot_dimension_numbers<[2], [1], [1], [2], [0, 0, 0, 1, 1, 2], [0], [0]>} : vector<1x16x16xf32>, vector<1x16x16xf32>, vector<1x16x16xf32> -> vector<1x16x16xf32>
    "tpu.trace_stop"() : () -> ()
    %30 = arith.addf %24, %29 : vector<1x16x16xf32>
    %c0_41 = arith.constant 0 : index
    %c3_42 = arith.constant 3 : index
    %c0_43 = arith.constant 0 : index
    %31 = vector.load %arg5[%c0_41, %c3_42, %c0_43] : memref<1x22x16xf32, #tpu.memory_space<vmem>>, vector<1x16x16xf32>
    %c0_44 = arith.constant 0 : index
    %c3_45 = arith.constant 3 : index
    %c0_46 = arith.constant 0 : index
    %c0_47 = arith.constant 0 : index
    %32 = vector.load %arg2[%c0_44, %c3_45, %c0_46, %c0_47] : memref<2x7x16x16xf32, #tpu.memory_space<vmem>>, vector<1x1x16x16xf32>
    %33 = vector.shape_cast %32 : vector<1x1x16x16xf32> to vector<16x16xf32>
    %34 = vector.shape_cast %33 : vector<16x16xf32> to vector<1x16x16xf32>
    "tpu.trace_start"() <{level = 10 : i32, message = "bhj,bjw->bhw"}> : () -> ()
    %cst_48 = arith.constant dense<0.000000e+00> : vector<1x16x16xf32>
    %35 = tpu.matmul %31, %34, %cst_48 {dimension_numbers = #tpu.dot_dimension_numbers<[2], [1], [1], [2], [0, 0, 0, 1, 1, 2], [0], [0]>} : vector<1x16x16xf32>, vector<1x16x16xf32>, vector<1x16x16xf32> -> vector<1x16x16xf32>
    "tpu.trace_stop"() : () -> ()
    %36 = arith.addf %30, %35 : vector<1x16x16xf32>
    %c0_49 = arith.constant 0 : index
    %c4 = arith.constant 4 : index
    %c0_50 = arith.constant 0 : index
    %37 = vector.load %arg5[%c0_49, %c4, %c0_50] : memref<1x22x16xf32, #tpu.memory_space<vmem>>, vector<1x16x16xf32>
    %c0_51 = arith.constant 0 : index
    %c4_52 = arith.constant 4 : index
    %c0_53 = arith.constant 0 : index
    %c0_54 = arith.constant 0 : index
    %38 = vector.load %arg2[%c0_51, %c4_52, %c0_53, %c0_54] : memref<2x7x16x16xf32, #tpu.memory_space<vmem>>, vector<1x1x16x16xf32>
    %39 = vector.shape_cast %38 : vector<1x1x16x16xf32> to vector<16x16xf32>
    %40 = vector.shape_cast %39 : vector<16x16xf32> to vector<1x16x16xf32>
    "tpu.trace_start"() <{level = 10 : i32, message = "bhj,bjw->bhw"}> : () -> ()
    %cst_55 = arith.constant dense<0.000000e+00> : vector<1x16x16xf32>
    %41 = tpu.matmul %37, %40, %cst_55 {dimension_numbers = #tpu.dot_dimension_numbers<[2], [1], [1], [2], [0, 0, 0, 1, 1, 2], [0], [0]>} : vector<1x16x16xf32>, vector<1x16x16xf32>, vector<1x16x16xf32> -> vector<1x16x16xf32>
    "tpu.trace_stop"() : () -> ()
    %42 = arith.addf %36, %41 : vector<1x16x16xf32>
    %c0_56 = arith.constant 0 : index
    %c5 = arith.constant 5 : index
    %c0_57 = arith.constant 0 : index
    %43 = vector.load %arg5[%c0_56, %c5, %c0_57] : memref<1x22x16xf32, #tpu.memory_space<vmem>>, vector<1x16x16xf32>
    %c0_58 = arith.constant 0 : index
    %c5_59 = arith.constant 5 : index
    %c0_60 = arith.constant 0 : index
    %c0_61 = arith.constant 0 : index
    %44 = vector.load %arg2[%c0_58, %c5_59, %c0_60, %c0_61] : memref<2x7x16x16xf32, #tpu.memory_space<vmem>>, vector<1x1x16x16xf32>
    %45 = vector.shape_cast %44 : vector<1x1x16x16xf32> to vector<16x16xf32>
    %46 = vector.shape_cast %45 : vector<16x16xf32> to vector<1x16x16xf32>
    "tpu.trace_start"() <{level = 10 : i32, message = "bhj,bjw->bhw"}> : () -> ()
    %cst_62 = arith.constant dense<0.000000e+00> : vector<1x16x16xf32>
    %47 = tpu.matmul %43, %46, %cst_62 {dimension_numbers = #tpu.dot_dimension_numbers<[2], [1], [1], [2], [0, 0, 0, 1, 1, 2], [0], [0]>} : vector<1x16x16xf32>, vector<1x16x16xf32>, vector<1x16x16xf32> -> vector<1x16x16xf32>
    "tpu.trace_stop"() : () -> ()
    %48 = arith.addf %42, %47 : vector<1x16x16xf32>
    %c0_63 = arith.constant 0 : index
    %c6 = arith.constant 6 : index
    %c0_64 = arith.constant 0 : index
    %49 = vector.load %arg5[%c0_63, %c6, %c0_64] : memref<1x22x16xf32, #tpu.memory_space<vmem>>, vector<1x16x16xf32>
    %c0_65 = arith.constant 0 : index
    %c6_66 = arith.constant 6 : index
    %c0_67 = arith.constant 0 : index
    %c0_68 = arith.constant 0 : index
    %50 = vector.load %arg2[%c0_65, %c6_66, %c0_67, %c0_68] : memref<2x7x16x16xf32, #tpu.memory_space<vmem>>, vector<1x1x16x16xf32>
    %51 = vector.shape_cast %50 : vector<1x1x16x16xf32> to vector<16x16xf32>
    %52 = vector.shape_cast %51 : vector<16x16xf32> to vector<1x16x16xf32>
    "tpu.trace_start"() <{level = 10 : i32, message = "bhj,bjw->bhw"}> : () -> ()
    %cst_69 = arith.constant dense<0.000000e+00> : vector<1x16x16xf32>
    %53 = tpu.matmul %49, %52, %cst_69 {dimension_numbers = #tpu.dot_dimension_numbers<[2], [1], [1], [2], [0, 0, 0, 1, 1, 2], [0], [0]>} : vector<1x16x16xf32>, vector<1x16x16xf32>, vector<1x16x16xf32> -> vector<1x16x16xf32>
    "tpu.trace_stop"() : () -> ()
    %54 = arith.addf %48, %53 : vector<1x16x16xf32>
    %c0_70 = arith.constant 0 : index
    %c0_71 = arith.constant 0 : index
    %c0_72 = arith.constant 0 : index
    %55 = vector.load %arg6[%c0_70, %c0_71, %c0_72] : memref<1x22x16xf32, #tpu.memory_space<vmem>>, vector<1x16x16xf32>
    %c1_73 = arith.constant 1 : index
    %c0_74 = arith.constant 0 : index
    %c0_75 = arith.constant 0 : index
    %c0_76 = arith.constant 0 : index
    %56 = vector.load %arg2[%c1_73, %c0_74, %c0_75, %c0_76] : memref<2x7x16x16xf32, #tpu.memory_space<vmem>>, vector<1x1x16x16xf32>
    %57 = vector.shape_cast %56 : vector<1x1x16x16xf32> to vector<16x16xf32>
    %58 = vector.shape_cast %57 : vector<16x16xf32> to vector<1x16x16xf32>
    "tpu.trace_start"() <{level = 10 : i32, message = "bhj,bjw->bhw"}> : () -> ()
    %cst_77 = arith.constant dense<0.000000e+00> : vector<1x16x16xf32>
    %59 = tpu.matmul %55, %58, %cst_77 {dimension_numbers = #tpu.dot_dimension_numbers<[2], [1], [1], [2], [0, 0, 0, 1, 1, 2], [0], [0]>} : vector<1x16x16xf32>, vector<1x16x16xf32>, vector<1x16x16xf32> -> vector<1x16x16xf32>
    "tpu.trace_stop"() : () -> ()
    %60 = arith.addf %54, %59 : vector<1x16x16xf32>
    %c0_78 = arith.constant 0 : index
    %c1_79 = arith.constant 1 : index
    %c0_80 = arith.constant 0 : index
    %61 = vector.load %arg6[%c0_78, %c1_79, %c0_80] : memref<1x22x16xf32, #tpu.memory_space<vmem>>, vector<1x16x16xf32>
    %c1_81 = arith.constant 1 : index
    %c1_82 = arith.constant 1 : index
    %c0_83 = arith.constant 0 : index
    %c0_84 = arith.constant 0 : index
    %62 = vector.load %arg2[%c1_81, %c1_82, %c0_83, %c0_84] : memref<2x7x16x16xf32, #tpu.memory_space<vmem>>, vector<1x1x16x16xf32>
    %63 = vector.shape_cast %62 : vector<1x1x16x16xf32> to vector<16x16xf32>
    %64 = vector.shape_cast %63 : vector<16x16xf32> to vector<1x16x16xf32>
    "tpu.trace_start"() <{level = 10 : i32, message = "bhj,bjw->bhw"}> : () -> ()
    %cst_85 = arith.constant dense<0.000000e+00> : vector<1x16x16xf32>
    %65 = tpu.matmul %61, %64, %cst_85 {dimension_numbers = #tpu.dot_dimension_numbers<[2], [1], [1], [2], [0, 0, 0, 1, 1, 2], [0], [0]>} : vector<1x16x16xf32>, vector<1x16x16xf32>, vector<1x16x16xf32> -> vector<1x16x16xf32>
    "tpu.trace_stop"() : () -> ()
    %66 = arith.addf %60, %65 : vector<1x16x16xf32>
    %c0_86 = arith.constant 0 : index
    %c2_87 = arith.constant 2 : index
    %c0_88 = arith.constant 0 : index
    %67 = vector.load %arg6[%c0_86, %c2_87, %c0_88] : memref<1x22x16xf32, #tpu.memory_space<vmem>>, vector<1x16x16xf32>
    %c1_89 = arith.constant 1 : index
    %c2_90 = arith.constant 2 : index
    %c0_91 = arith.constant 0 : index
    %c0_92 = arith.constant 0 : index
    %68 = vector.load %arg2[%c1_89, %c2_90, %c0_91, %c0_92] : memref<2x7x16x16xf32, #tpu.memory_space<vmem>>, vector<1x1x16x16xf32>
    %69 = vector.shape_cast %68 : vector<1x1x16x16xf32> to vector<16x16xf32>
    %70 = vector.shape_cast %69 : vector<16x16xf32> to vector<1x16x16xf32>
    "tpu.trace_start"() <{level = 10 : i32, message = "bhj,bjw->bhw"}> : () -> ()
    %cst_93 = arith.constant dense<0.000000e+00> : vector<1x16x16xf32>
    %71 = tpu.matmul %67, %70, %cst_93 {dimension_numbers = #tpu.dot_dimension_numbers<[2], [1], [1], [2], [0, 0, 0, 1, 1, 2], [0], [0]>} : vector<1x16x16xf32>, vector<1x16x16xf32>, vector<1x16x16xf32> -> vector<1x16x16xf32>
    "tpu.trace_stop"() : () -> ()
    %72 = arith.addf %66, %71 : vector<1x16x16xf32>
    %c0_94 = arith.constant 0 : index
    %c3_95 = arith.constant 3 : index
    %c0_96 = arith.constant 0 : index
    %73 = vector.load %arg6[%c0_94, %c3_95, %c0_96] : memref<1x22x16xf32, #tpu.memory_space<vmem>>, vector<1x16x16xf32>
    %c1_97 = arith.constant 1 : index
    %c3_98 = arith.constant 3 : index
    %c0_99 = arith.constant 0 : index
    %c0_100 = arith.constant 0 : index
    %74 = vector.load %arg2[%c1_97, %c3_98, %c0_99, %c0_100] : memref<2x7x16x16xf32, #tpu.memory_space<vmem>>, vector<1x1x16x16xf32>
    %75 = vector.shape_cast %74 : vector<1x1x16x16xf32> to vector<16x16xf32>
    %76 = vector.shape_cast %75 : vector<16x16xf32> to vector<1x16x16xf32>
    "tpu.trace_start"() <{level = 10 : i32, message = "bhj,bjw->bhw"}> : () -> ()
    %cst_101 = arith.constant dense<0.000000e+00> : vector<1x16x16xf32>
    %77 = tpu.matmul %73, %76, %cst_101 {dimension_numbers = #tpu.dot_dimension_numbers<[2], [1], [1], [2], [0, 0, 0, 1, 1, 2], [0], [0]>} : vector<1x16x16xf32>, vector<1x16x16xf32>, vector<1x16x16xf32> -> vector<1x16x16xf32>
    "tpu.trace_stop"() : () -> ()
    %78 = arith.addf %72, %77 : vector<1x16x16xf32>
    %c0_102 = arith.constant 0 : index
    %c4_103 = arith.constant 4 : index
    %c0_104 = arith.constant 0 : index
    %79 = vector.load %arg6[%c0_102, %c4_103, %c0_104] : memref<1x22x16xf32, #tpu.memory_space<vmem>>, vector<1x16x16xf32>
    %c1_105 = arith.constant 1 : index
    %c4_106 = arith.constant 4 : index
    %c0_107 = arith.constant 0 : index
    %c0_108 = arith.constant 0 : index
    %80 = vector.load %arg2[%c1_105, %c4_106, %c0_107, %c0_108] : memref<2x7x16x16xf32, #tpu.memory_space<vmem>>, vector<1x1x16x16xf32>
    %81 = vector.shape_cast %80 : vector<1x1x16x16xf32> to vector<16x16xf32>
    %82 = vector.shape_cast %81 : vector<16x16xf32> to vector<1x16x16xf32>
    "tpu.trace_start"() <{level = 10 : i32, message = "bhj,bjw->bhw"}> : () -> ()
    %cst_109 = arith.constant dense<0.000000e+00> : vector<1x16x16xf32>
    %83 = tpu.matmul %79, %82, %cst_109 {dimension_numbers = #tpu.dot_dimension_numbers<[2], [1], [1], [2], [0, 0, 0, 1, 1, 2], [0], [0]>} : vector<1x16x16xf32>, vector<1x16x16xf32>, vector<1x16x16xf32> -> vector<1x16x16xf32>
    "tpu.trace_stop"() : () -> ()
    %84 = arith.addf %78, %83 : vector<1x16x16xf32>
    %c0_110 = arith.constant 0 : index
    %c5_111 = arith.constant 5 : index
    %c0_112 = arith.constant 0 : index
    %85 = vector.load %arg6[%c0_110, %c5_111, %c0_112] : memref<1x22x16xf32, #tpu.memory_space<vmem>>, vector<1x16x16xf32>
    %c1_113 = arith.constant 1 : index
    %c5_114 = arith.constant 5 : index
    %c0_115 = arith.constant 0 : index
    %c0_116 = arith.constant 0 : index
    %86 = vector.load %arg2[%c1_113, %c5_114, %c0_115, %c0_116] : memref<2x7x16x16xf32, #tpu.memory_space<vmem>>, vector<1x1x16x16xf32>
    %87 = vector.shape_cast %86 : vector<1x1x16x16xf32> to vector<16x16xf32>
    %88 = vector.shape_cast %87 : vector<16x16xf32> to vector<1x16x16xf32>
    "tpu.trace_start"() <{level = 10 : i32, message = "bhj,bjw->bhw"}> : () -> ()
    %cst_117 = arith.constant dense<0.000000e+00> : vector<1x16x16xf32>
    %89 = tpu.matmul %85, %88, %cst_117 {dimension_numbers = #tpu.dot_dimension_numbers<[2], [1], [1], [2], [0, 0, 0, 1, 1, 2], [0], [0]>} : vector<1x16x16xf32>, vector<1x16x16xf32>, vector<1x16x16xf32> -> vector<1x16x16xf32>
    "tpu.trace_stop"() : () -> ()
    %90 = arith.addf %84, %89 : vector<1x16x16xf32>
    %c0_118 = arith.constant 0 : index
    %c6_119 = arith.constant 6 : index
    %c0_120 = arith.constant 0 : index
    %91 = vector.load %arg6[%c0_118, %c6_119, %c0_120] : memref<1x22x16xf32, #tpu.memory_space<vmem>>, vector<1x16x16xf32>
    %c1_121 = arith.constant 1 : index
    %c6_122 = arith.constant 6 : index
    %c0_123 = arith.constant 0 : index
    %c0_124 = arith.constant 0 : index
    %92 = vector.load %arg2[%c1_121, %c6_122, %c0_123, %c0_124] : memref<2x7x16x16xf32, #tpu.memory_space<vmem>>, vector<1x1x16x16xf32>
    %93 = vector.shape_cast %92 : vector<1x1x16x16xf32> to vector<16x16xf32>
    %94 = vector.shape_cast %93 : vector<16x16xf32> to vector<1x16x16xf32>
    "tpu.trace_start"() <{level = 10 : i32, message = "bhj,bjw->bhw"}> : () -> ()
    %cst_125 = arith.constant dense<0.000000e+00> : vector<1x16x16xf32>
    %95 = tpu.matmul %91, %94, %cst_125 {dimension_numbers = #tpu.dot_dimension_numbers<[2], [1], [1], [2], [0, 0, 0, 1, 1, 2], [0], [0]>} : vector<1x16x16xf32>, vector<1x16x16xf32>, vector<1x16x16xf32> -> vector<1x16x16xf32>
    "tpu.trace_stop"() : () -> ()
    %96 = arith.addf %90, %95 : vector<1x16x16xf32>
    %97 = arith.negf %96 : vector<1x16x16xf32>
    %98 = math.exp %97 : vector<1x16x16xf32>
    %cst_126 = arith.constant 1.000000e+00 : f32
    %99 = vector.broadcast %cst_126 : f32 to vector<1x16x16xf32>
    %100 = arith.addf %99, %98 : vector<1x16x16xf32>
    %101 = arith.divf %99, %100 : vector<1x16x16xf32>
    %c0_127 = arith.constant 0 : index
    %c0_128 = arith.constant 0 : index
    %c0_129 = arith.constant 0 : index
    %102 = vector.load %arg4[%c0_127, %c0_128, %c0_129] : memref<1x16x16xf32, #tpu.memory_space<vmem>>, vector<1x16x16xf32>
    tpu.vector_store %arg4[%c0_127, %c0_128, %c0_129], %101 {strides = array<i32>} : memref<1x16x16xf32, #tpu.memory_space<vmem>>, vector<1x16x16xf32>,
    return
  }
  func.func @transform_0(%arg0: i32) -> i32 {
    %c0_i32 = arith.constant 0 : i32
    %c0_i32_0 = arith.constant 0 : i32
    return %c0_i32 : i32
  }
  func.func @transform_1(%arg0: i32) -> (i32, i32, i32, i32) {
    %c0_i32 = arith.constant 0 : i32
    %c0_i32_0 = arith.constant 0 : i32
    %c0_i32_1 = arith.constant 0 : i32
    %c0_i32_2 = arith.constant 0 : i32
    %c0_i32_3 = arith.constant 0 : i32
    return %c0_i32, %c0_i32_0, %c0_i32_1, %c0_i32_2 : i32, i32, i32, i32
  }
  func.func @transform_2(%arg0: i32) -> (i32, i32, i32, i32) {
    %c0_i32 = arith.constant 0 : i32
    %c0_i32_0 = arith.constant 0 : i32
    %c0_i32_1 = arith.constant 0 : i32
    %c0_i32_2 = arith.constant 0 : i32
    return %arg0, %c0_i32, %c0_i32_0, %c0_i32_1 : i32, i32, i32, i32
  }
  func.func @transform_3(%arg0: i32) -> (i32, i32, i32) {
    %c0_i32 = arith.constant 0 : i32
    %c0_i32_0 = arith.constant 0 : i32
    %c0_i32_1 = arith.constant 0 : i32
    return %arg0, %c0_i32, %c0_i32_0 : i32, i32, i32
  }
}

</mosaic_0001>

<llo_original>
// kernel: tpu_custom_call.1
$region0: #{tpu_custom_call.1}
  #allocation0 [shape = 'u32[]', space=smem, size = 0x4, offset = 0x4, fixed_abs, tag = 'smem constant byte address 0x4 - core index']
  #allocation1 [shape = 'u32[144,128]{1,0:T(1,128)}', space=vmem, size = 0x12000, scoped, tag = 'internal scratch']
  #allocation2 [shape = 'f32[1,22,16]{2,1,0:T(8,128)}', space=vmem, size = 0x3000, scoped, tag = 'scratch operand']
  #allocation3 [shape = 'f32[1,22,16]{2,1,0:T(8,128)}', space=vmem, size = 0x3000, scoped, tag = 'scratch operand']
  #allocation4 [shape = 'f32[1]{0:T(128)S(6)}', space=smem, size = 0x200, scoped, tag = 'scoped memory for tpu_custom_call.1']
  %s0 = inlined_call_operand.<no memory space> [shape: f32[1], index: 0, kind: input, shape index: {}]
  %s1 = inlined_call_operand.hbm [shape: f32[2,7,16,16], index: 1, kind: input, shape index: {}]
  %s2 = inlined_call_operand.hbm [shape: f32[2,4,16,16], index: 2, kind: input, shape index: {}]
  %s3 = inlined_call_operand.hbm [shape: f32[2,16,16], index: 3, kind: output, shape index: {}]
  %s4 = sld [smem:[#allocation0]]
  $region53: #{tpu_custom_call.1} parent=0
    _
  %s6 = ssub.s32 1, %s4
  %s7 = scalar_select 0, %s6, %s4
  %8 = sst [smem:[#allocation4]] %s0
  $region1: #{tpu_custom_call.1} parent=0
    #allocation5 [shape = 'u8[114688]{0}', space=vmem, size = 0x1c000, scoped, tag = 'input window, operand 1, single buffered']
    #allocation6 [shape = 's32[2]{0}', space=sflag, size = 0x8, scoped, tag = 'scoped memory for tpu_custom_call.1']
    #allocation7 [shape = 's32[2]{0}', space=sflag, size = 0x8, scoped, tag = 'scoped memory for tpu_custom_call.1']
    #allocation8 [shape = 'u8[65536]{0}', space=vmem, size = 0x10000, scoped, tag = 'input window, operand 2']
    #allocation9 [shape = 's32[2]{0}', space=sflag, size = 0x8, scoped, tag = 'scoped memory for tpu_custom_call.1']
    #allocation10 [shape = 'u8[16384]{0}', space=vmem, size = 0x4000, scoped, tag = 'output window, operand 0']
    %9 = vsyncpa [#allocation6], 0
    %10 = vsyncpa [#allocation9], 0
    %s11 = scalar_lea.sflag [#allocation9], 1
    %12 = vsyncpa %s11, 0
    %13 = vsyncpa [#allocation7], 0
    %s14 = scalar_lea.sflag [#allocation7], 1
    %15 = vsyncpa %s14, 0
    loop: start=0, step=1, limit=4
    $region2: #{tpu_custom_call.1} parent=1 // loop_pre_header
      _
    $region3: #{tpu_custom_call.1} parent=1 // loop_header
      %s17 = sphi 0, %s21
      %p18 = scmp.ge.s32.totalorder %s17, 4
      %s25 = sphi 0, %s25
      %s27 = sphi 0, %s25
      %s28 = sphi 0, %s27
      %s42 = sphi 0, %s28
      %s46 = sphi 0, %s46
      %s48 = sphi 0, %s46
      %s49 = sphi 0, %s48
      %s63 = sphi 0, %s49
      %s69 = sphi 0, %s71
      %s72 = sphi 0, %s69
      %s73 = sphi 0, %s72
      %s89 = sphi 0, %s73
      %s95 = sphi 0, %s97
      %s98 = sphi 0, %s95
      %s99 = sphi 0, %s98
      %s115 = sphi 0, %s99
    $region4: #{tpu_custom_call.1} parent=1 // loop_header_branch
      %20 = sbr.rel (%p18) target = $region8
    $region5: #{tpu_custom_call.1} parent=1 // loop_body
      %s22 = ssub.s32 %s17, 1
      %s23 = ssub.s32 %s17, 2
      %s24 = sadd.s32 %s17, 1
      %s26 = sadd.s32 %s25, 1
      %p29 = scmp.eq.s32.totalorder %s17, 1
      %p30 = scmp.ne.s32.totalorder %s25, %s27
      %p31 = scmp.eq.s32.totalorder %s17, 0
      %p32 = por %p30, %p31
      %p33 = scmp.ne.s32.totalorder %s25, %s27
      %p34 = scmp.eq.s32.totalorder %s22, 1
      %p35 = por %p33, %p34
      %p36 = scmp.ne.s32.totalorder %s27, %s28
      %p37 = scmp.eq.s32.totalorder %s22, 0
      %p38 = por %p36, %p37
      %p39 = scmp.ne.s32.totalorder %s27, %s28
      %p40 = scmp.eq.s32.totalorder %s23, 1
      %p41 = por %p39, %p40
      %p43 = scmp.ne.s32.totalorder %s28, %s42
      %p44 = scmp.eq.s32.totalorder %s23, 0
      %p45 = por %p43, %p44
      %s47 = sadd.s32 %s46, 1
      %p50 = scmp.eq.s32.totalorder %s17, 1
      %p51 = scmp.ne.s32.totalorder %s46, %s48
      %p52 = scmp.eq.s32.totalorder %s17, 0
      %p53 = por %p51, %p52
      %p54 = scmp.ne.s32.totalorder %s46, %s48
      %p55 = scmp.eq.s32.totalorder %s22, 1
      %p56 = por %p54, %p55
      %p57 = scmp.ne.s32.totalorder %s48, %s49
      %p58 = scmp.eq.s32.totalorder %s22, 0
      %p59 = por %p57, %p58
      %p60 = scmp.ne.s32.totalorder %s48, %s49
      %p61 = scmp.eq.s32.totalorder %s23, 1
      %p62 = por %p60, %p61
      %p64 = scmp.ne.s32.totalorder %s49, %s63
      %p65 = scmp.eq.s32.totalorder %s23, 0
      %p66 = por %p64, %p65
      %s67 = ssub.s32 %s17, %s24
      %p68 = scmp.eq.s32.totalorder %s67, 0
      %s70 = sadd.s32 %s69, 1
      %s71 = scalar_select %p68, %s69, %s70
      %p74 = pneg %p68
      %p75 = scmp.eq.s32.totalorder %s17, 1
      %p76 = por %p74, %p75
      %p77 = scmp.ne.s32.totalorder %s69, %s72
      %p78 = scmp.eq.s32.totalorder %s17, 0
      %p79 = por %p77, %p78
      %p80 = scmp.ne.s32.totalorder %s69, %s72
      %p81 = scmp.eq.s32.totalorder %s22, 1
      %p82 = por %p80, %p81
      %p83 = scmp.ne.s32.totalorder %s72, %s73
      %p84 = scmp.eq.s32.totalorder %s22, 0
      %p85 = por %p83, %p84
      %p86 = scmp.ne.s32.totalorder %s72, %s73
      %p87 = scmp.eq.s32.totalorder %s23, 1
      %p88 = por %p86, %p87
      %p90 = scmp.ne.s32.totalorder %s73, %s89
      %p91 = scmp.eq.s32.totalorder %s23, 0
      %p92 = por %p90, %p91
      %s93 = ssub.s32 %s17, %s24
      %p94 = scmp.eq.s32.totalorder %s93, 0
      %s96 = sadd.s32 %s95, 1
      %s97 = scalar_select %p94, %s95, %s96
      %p100 = pneg %p94
      %p101 = scmp.eq.s32.totalorder %s17, 1
      %p102 = por %p100, %p101
      %p103 = scmp.ne.s32.totalorder %s95, %s98
      %p104 = scmp.eq.s32.totalorder %s17, 0
      %p105 = por %p103, %p104
      %p106 = scmp.ne.s32.totalorder %s95, %s98
      %p107 = scmp.eq.s32.totalorder %s22, 1
      %p108 = por %p106, %p107
      %p109 = scmp.ne.s32.totalorder %s98, %s99
      %p110 = scmp.eq.s32.totalorder %s22, 0
      %p111 = por %p109, %p110
      %p112 = scmp.ne.s32.totalorder %s98, %s99
      %p113 = scmp.eq.s32.totalorder %s23, 1
      %p114 = por %p112, %p113
      %p116 = scmp.ne.s32.totalorder %s99, %s115
      %p117 = scmp.eq.s32.totalorder %s23, 0
      %p118 = por %p116, %p117
      %p119 = scmp.le.s32.totalorder 1, %s17
      %p120 = scmp.lt.s32.totalorder %s17, 3
      %p121 = pnand %p119, %p120
      %p122 = pneg %p121
      // Predicated region
      $region9: #{tpu_custom_call.1} parent=5 // pred_check
        _
      $region10: #{tpu_custom_call.1} parent=5 // pred_check_branch
        %124 = sbr.rel (%p121) target = $region12
      $region11: #{tpu_custom_call.1} parent=5 // pred_region
        %s125 = ssub.s32 %s17, 1
        // Predicated region
        $region13: #{tpu_custom_call.1} parent=11 // pred_check
          %p126 = pneg %p38
        $region14: #{tpu_custom_call.1} parent=11 // pred_check_branch
          %128 = sbr.rel (%p126) target = $region16
        $region15: #{tpu_custom_call.1} parent=11 // pred_region
          _
        $region16: #{tpu_custom_call.1} parent=11 // pred_fallthru
          _
        // Predicated region
        $region17: #{tpu_custom_call.1} parent=11 // pred_check
          %p129 = pneg %p59
        $region18: #{tpu_custom_call.1} parent=11 // pred_check_branch
          %131 = sbr.rel (%p129) target = $region20
        $region19: #{tpu_custom_call.1} parent=11 // pred_region
          %s133 = ssub.s32 3584, 3584
          %134 = vsyncadd [#allocation6], %s133
          %s135 = sshll.u32 [#allocation5], 4
          %s136 = int_to_ptr.vmem [resolvable:$true] %s135
          %141 = dma.hbm_to_vmem [thread:$0]  %s1, 3584, %s136, [#allocation6], 128, 128, 8
        $region20: #{tpu_custom_call.1} parent=11 // pred_fallthru
          _
      $region12: #{tpu_custom_call.1} parent=5 // pred_fallthru
        _
      %p142 = scmp.lt.s32.totalorder %s17, 2
      // Predicated region
      $region21: #{tpu_custom_call.1} parent=5 // pred_check
        %p143 = pneg %p142
      $region22: #{tpu_custom_call.1} parent=5 // pred_check_branch
        %145 = sbr.rel (%p143) target = $region24
      $region23: #{tpu_custom_call.1} parent=5 // pred_region
        // Predicated region
        $region25: #{tpu_custom_call.1} parent=23 // pred_check
          %p146 = pneg %p79
        $region26: #{tpu_custom_call.1} parent=23 // pred_check_branch
          %148 = sbr.rel (%p146) target = $region28
        $region27: #{tpu_custom_call.1} parent=23 // pred_region
          %s149 = sand.u32 %s69, 1
          %s150 = scalar_lea.sflag [#allocation9], %s149
          %s151 = sand.u32 %s69, 1
          %s152 = smul.addr %s151, 64
          %s153 = scalar_lea.vmem [#allocation8], %s152
          %s155 = ssub.s32 1024, 1024
          %156 = vsyncadd %s150, %s155
          %s157 = smul.addr %s17, 8
          %s158 = smul.addr %s157, 128
          %s159 = scalar_lea.hbm %s2, %s158
          %s160 = sshll.u32 %s153, 4
          %s161 = int_to_ptr.vmem [resolvable:$true] %s160
          %166 = dma.hbm_to_vmem [thread:$0]  %s159, 1024, %s161, %s150, 128, 128, 8
        $region28: #{tpu_custom_call.1} parent=23 // pred_fallthru
          _
      $region24: #{tpu_custom_call.1} parent=5 // pred_fallthru
        _
      %p167 = scmp.le.s32.totalorder 1, %s17
      %p168 = scmp.lt.s32.totalorder %s17, 3
      %p169 = pnand %p167, %p168
      %p170 = pneg %p169
      // Predicated region
      $region29: #{tpu_custom_call.1} parent=5 // pred_check
        _
      $region30: #{tpu_custom_call.1} parent=5 // pred_check_branch
        %172 = sbr.rel (%p169) target = $region32
      $region31: #{tpu_custom_call.1} parent=5 // pred_region
        %s173 = ssub.s32 %s17, 1
        // Predicated region
        $region33: #{tpu_custom_call.1} parent=31 // pred_check
          %p174 = pneg %p59
        $region34: #{tpu_custom_call.1} parent=31 // pred_check_branch
          %176 = sbr.rel (%p174) target = $region36
        $region35: #{tpu_custom_call.1} parent=31 // pred_region
          %177 = dma.done [#allocation6], 3584
        $region36: #{tpu_custom_call.1} parent=31 // pred_fallthru
          _
        %s178 = sand.u32 %s72, 1
        %s179 = scalar_lea.sflag [#allocation9], %s178
        %s180 = sand.u32 %s72, 1
        %s181 = smul.addr %s180, 64
        %s182 = scalar_lea.vmem [#allocation8], %s181
        // Predicated region
        $region37: #{tpu_custom_call.1} parent=31 // pred_check
          %p183 = pneg %p85
        $region38: #{tpu_custom_call.1} parent=31 // pred_check_branch
          %185 = sbr.rel (%p183) target = $region40
        $region39: #{tpu_custom_call.1} parent=31 // pred_region
          %186 = dma.done %s179, 1024
        $region40: #{tpu_custom_call.1} parent=31 // pred_fallthru
          _
        %p187 = pneg %p38
        %p188 = pneg %p35
        %p189 = pneg %p59
        %p190 = pneg %p56
        %s191 = sand.u32 %s72, 1
        %s192 = scalar_lea.sflag [#allocation9], %s191
        %s193 = sand.u32 %s72, 1
        %s194 = smul.addr %s193, 64
        %s195 = scalar_lea.vmem [#allocation8], %s194
        %p196 = pneg %p85
        %p197 = pneg %p82
        %p198 = pneg %p111
        %p199 = pneg %p108
        %s200 = sand.u32 %s98, 1
        %s201 = scalar_lea.sflag [#allocation7], %s200
        %s202 = sand.u32 %s98, 1
        %s203 = smul.addr %s202, 16
        %s204 = scalar_lea.vmem [#allocation10], %s203
        %v205 = vld [vmem:[%s182] sm:$0xff]
        %v206 = vld [vmem:[%s182 + $0x8] sm:$0xff]
        %v207 = vld [vmem:[%s182 + $0x10] sm:$0xff]
        %v208 = vld [vmem:[%s182 + $0x18] sm:$0xff]
        %v209 = vld [vmem:[%s182 + $0x20] sm:$0xff]
        %v210 = vld [vmem:[%s182 + $0x28] sm:$0xff]
        %v211 = vld [vmem:[%s182 + $0x30] sm:$0xff]
        %v212 = vld [vmem:[%s182 + $0x38] sm:$0xff]
        %vm213 = vcmask 130048
        %v214 = vsel %vm213, %v205, 0.0
        %v215 = vsel %vm213, %v207, 0.0
        %v216 = vadd.f32 %v214, %v215
        %v217 = vsel %vm213, %v209, 0.0
        %v218 = vadd.f32 %v216, %v217
        %v219 = vsel %vm213, %v211, 0.0
        %v220 = vadd.f32 %v218, %v219
        %v221 = vsel %vm213, %v206, 0.0
        %v222 = vsel %vm213, %v208, 0.0
        %v223 = vadd.f32 %v221, %v222
        %v224 = vsel %vm213, %v210, 0.0
        %v225 = vadd.f32 %v223, %v224
        %v226 = vsel %vm213, %v212, 0.0
        %v227 = vadd.f32 %v225, %v226
        %v228 = vrcp.pop 4.0
        %v229 = vmul.f32 %v220, %v228
        %v230 = vmul.f32 %v227, %v228
        %v231 = vsel %vm213, %v205, -inf
        %v232 = vsel %vm213, %v207, -inf
        %v233 = vsel %vm213, %v209, -inf
        %v234 = vmax.f32 %v231, %v233
        %v235 = vsel %vm213, %v211, -inf
        %v236 = vmax.f32 %v232, %v235
        %v237 = vmax.f32 %v234, %v236
        %v238 = vsel %vm213, %v206, -inf
        %v239 = vsel %vm213, %v208, -inf
        %v240 = vsel %vm213, %v210, -inf
        %v241 = vmax.f32 %v238, %v240
        %v242 = vsel %vm213, %v212, -inf
        %v243 = vmax.f32 %v239, %v242
        %v244 = vmax.f32 %v241, %v243
        %245 = vst.msk [vmem:[#allocation2] sm:$0xff] %vm213, 0.0
        %246 = vst.msk [vmem:[#allocation2 + $0x8] sm:$0xff] %vm213, 0.0
        %vm247 = vcmask 128000
        %248 = vst.msk [vmem:[#allocation2 + $0x10] sm:$0x3f] %vm247, 0.0
        %249 = vst.msk [vmem:[#allocation3] sm:$0xff] %vm213, 0.0
        %250 = vst.msk [vmem:[#allocation3 + $0x8] sm:$0xff] %vm213, 0.0
        %251 = vst.msk [vmem:[#allocation3 + $0x10] sm:$0x3f] %vm247, 0.0
        %252 = vst.msk [vmem:[#allocation2 + $0x3] sm:$0xff] %vm213, %v229
        %253 = vst.msk [vmem:[#allocation2 + $0xb] sm:$0xff] %vm213, %v230
        %254 = vst.msk [vmem:[#allocation3 + $0x3] sm:$0xff] %vm213, %v237
        %255 = vst.msk [vmem:[#allocation3 + $0xb] sm:$0xff] %vm213, %v244
        %s256 = sld [smem:[#allocation4]]
        %v257 = vstv %s256
        %v258 = vld [vmem:[#allocation2] sm:$0xff]
        %v259 = vld [vmem:[#allocation2 + $0x8] sm:$0xff]
        %v260 = vld [vmem:[#allocation5] sm:$0xff]
        %v261 = vld [vmem:[#allocation5 + $0x8] sm:$0xff]
        %v263 = vsel %vm213, %v258, 0
        %v266 = vsel %vm213, %v259, 0
        %268 = vmatprep.subr.mxu0 0.0
        %269 = vmatpush1.msra.mxu0 %v260
        %270 = vmatprep.subr.mxu0 0.0
        %271 = vmatpush1.msra.mxu0 %v261
        %272 = vmatprep.subr.mxu0 0.0
        %273 = vmatpush1.msra.mxu0 0.0
        %274 = vmatprep.subr.mxu0 0.0
        %275 = vmatpush1.msra.mxu0 0.0
        %276 = vmatprep.subr.mxu0 0.0
        %277 = vmatpush1.msra.mxu0 0.0
        %278 = vmatprep.subr.mxu0 0.0
        %279 = vmatpush1.msra.mxu0 0.0
        %280 = vmatprep.subr.mxu0 0.0
        %281 = vmatpush1.msra.mxu0 0.0
        %282 = vmatprep.subr.mxu0 0.0
        %283 = vmatpush1.msra.mxu0 0.0
        %284 = vmatprep.subr.mxu0 0.0
        %285 = vmatpush1.msra.mxu0 0.0
        %286 = vmatprep.subr.mxu0 0.0
        %287 = vmatpush1.msra.mxu0 0.0
        %288 = vmatprep.subr.mxu0 0.0
        %289 = vmatpush1.msra.mxu0 0.0
        %290 = vmatprep.subr.mxu0 0.0
        %291 = vmatpush1.msra.mxu0 0.0
        %292 = vmatprep.subr.mxu0 0.0
        %293 = vmatpush1.msra.mxu0 0.0
        %294 = vmatprep.subr.mxu0 0.0
        %295 = vmatpush1.msra.mxu0 0.0
        %296 = vmatprep.subr.mxu0 0.0
        %297 = vmatpush1.msra.mxu0 0.0
        %298 = vmatprep.subr.mxu0 0.0
        %299 = vmatpush1.msra.mxu0 0.0
        %300 = vmatprep.subr.mxu0 0.0
        %301 = vmatpush1.msra.mxu0 0.0
        %302 = vmatprep.subr.mxu0 0.0
        %303 = vmatpush1.msra.mxu0 0.0
        %304 = vmatprep.subr.mxu0 0.0
        %305 = vmatpush1.msra.mxu0 0.0
        %306 = vmatprep.subr.mxu0 0.0
        %307 = vmatpush1.msra.mxu0 0.0
        %308 = vmatprep.subr.mxu0 0.0
        %309 = vmatpush1.msra.mxu0 0.0
        %310 = vmatprep.subr.mxu0 0.0
        %311 = vmatpush1.msra.mxu0 0.0
        %312 = vmatprep.subr.mxu0 0.0
        %313 = vmatpush1.msra.mxu0 0.0
        %314 = vmatprep.subr.mxu0 0.0
        %315 = vmatpush1.msra.mxu0 0.0
        %316 = vmatprep.subr.mxu0 0.0
        %317 = vmatpush1.msra.mxu0 0.0
        %318 = vmatprep.subr.mxu0 0.0
        %319 = vmatpush1.msra.mxu0 0.0
        %320 = vmatprep.subr.mxu0 0.0
        %321 = vmatpush1.msra.mxu0 0.0
        %322 = vmatprep.subr.mxu0 0.0
        %323 = vmatpush1.msra.mxu0 0.0
        %324 = vmatprep.subr.mxu0 0.0
        %325 = vmatpush1.msra.mxu0 0.0
        %326 = vmatprep.subr.mxu0 0.0
        %327 = vmatpush1.msra.mxu0 0.0
        %328 = vmatprep.subr.mxu0 0.0
        %329 = vmatpush1.msra.mxu0 0.0
        %330 = vmatprep.subr.mxu0 0.0
        %331 = vmatpush1.msra.mxu0 0.0
        %332 = vmatprep.mubr.f32.mxu0 0.0
        %333 = vmatmul.mubr.f32.gmra.mrb[0].mxu0 %v263
        %v334 = vpop.f32.mrb[0].mxu0
        %v335 = vadd.f32 0.0, %v334
        %v336 = vpop.f32.mrb[0].mxu0
        %337 = vmatprep.mubr.f32.mxu0 0.0
        %338 = vmatmul.mubr.f32.gmra.mrb[0].mxu0 %v266
        %v339 = vpop.f32.mrb[0].mxu0
        %v340 = vadd.f32 0.0, %v339
        %v341 = vpop.f32.mrb[0].mxu0
        %342 = vdwg.mxu0
        %v343 = vadd.f32 %v257, %v335
        %v344 = vadd.f32 %v257, %v340
        %v345 = vld [vmem:[#allocation2 + $0x1] sm:$0xff]
        %v346 = vld [vmem:[#allocation2 + $0x9] sm:$0xff]
        %s347 = scalar_lea.vmem [#allocation5], 16
        %v348 = vld [vmem:[%s347] sm:$0xff]
        %v349 = vld [vmem:[%s347 + $0x8] sm:$0xff]
        %v351 = vsel %vm213, %v345, 0
        %v354 = vsel %vm213, %v346, 0
        %356 = vmatprep.subr.mxu0 0.0
        %357 = vmatpush1.msra.mxu0 %v348
        %358 = vmatprep.subr.mxu0 0.0
        %359 = vmatpush1.msra.mxu0 %v349
        %360 = vmatprep.subr.mxu0 0.0
        %361 = vmatpush1.msra.mxu0 0.0
        %362 = vmatprep.subr.mxu0 0.0
        %363 = vmatpush1.msra.mxu0 0.0
        %364 = vmatprep.subr.mxu0 0.0
        %365 = vmatpush1.msra.mxu0 0.0
        %366 = vmatprep.subr.mxu0 0.0
        %367 = vmatpush1.msra.mxu0 0.0
        %368 = vmatprep.subr.mxu0 0.0
        %369 = vmatpush1.msra.mxu0 0.0
        %370 = vmatprep.subr.mxu0 0.0
        %371 = vmatpush1.msra.mxu0 0.0
        %372 = vmatprep.subr.mxu0 0.0
        %373 = vmatpush1.msra.mxu0 0.0
        %374 = vmatprep.subr.mxu0 0.0
        %375 = vmatpush1.msra.mxu0 0.0
        %376 = vmatprep.subr.mxu0 0.0
        %377 = vmatpush1.msra.mxu0 0.0
        %378 = vmatprep.subr.mxu0 0.0
        %379 = vmatpush1.msra.mxu0 0.0
        %380 = vmatprep.subr.mxu0 0.0
        %381 = vmatpush1.msra.mxu0 0.0
        %382 = vmatprep.subr.mxu0 0.0
        %383 = vmatpush1.msra.mxu0 0.0
        %384 = vmatprep.subr.mxu0 0.0
        %385 = vmatpush1.msra.mxu0 0.0
        %386 = vmatprep.subr.mxu0 0.0
        %387 = vmatpush1.msra.mxu0 0.0
        %388 = vmatprep.subr.mxu0 0.0
        %389 = vmatpush1.msra.mxu0 0.0
        %390 = vmatprep.subr.mxu0 0.0
        %391 = vmatpush1.msra.mxu0 0.0
        %392 = vmatprep.subr.mxu0 0.0
        %393 = vmatpush1.msra.mxu0 0.0
        %394 = vmatprep.subr.mxu0 0.0
        %395 = vmatpush1.msra.mxu0 0.0
        %396 = vmatprep.subr.mxu0 0.0
        %397 = vmatpush1.msra.mxu0 0.0
        %398 = vmatprep.subr.mxu0 0.0
        %399 = vmatpush1.msra.mxu0 0.0
        %400 = vmatprep.subr.mxu0 0.0
        %401 = vmatpush1.msra.mxu0 0.0
        %402 = vmatprep.subr.mxu0 0.0
        %403 = vmatpush1.msra.mxu0 0.0
        %404 = vmatprep.subr.mxu0 0.0
        %405 = vmatpush1.msra.mxu0 0.0
        %406 = vmatprep.subr.mxu0 0.0
        %407 = vmatpush1.msra.mxu0 0.0
        %408 = vmatprep.subr.mxu0 0.0
        %409 = vmatpush1.msra.mxu0 0.0
        %410 = vmatprep.subr.mxu0 0.0
        %411 = vmatpush1.msra.mxu0 0.0
        %412 = vmatprep.subr.mxu0 0.0
        %413 = vmatpush1.msra.mxu0 0.0
        %414 = vmatprep.subr.mxu0 0.0
        %415 = vmatpush1.msra.mxu0 0.0
        %416 = vmatprep.subr.mxu0 0.0
        %417 = vmatpush1.msra.mxu0 0.0
        %418 = vmatprep.subr.mxu0 0.0
        %419 = vmatpush1.msra.mxu0 0.0
        %420 = vmatprep.mubr.f32.mxu0 0.0
        %421 = vmatmul.mubr.f32.gmra.mrb[0].mxu0 %v351
        %v422 = vpop.f32.mrb[0].mxu0
        %v423 = vadd.f32 0.0, %v422
        %v424 = vpop.f32.mrb[0].mxu0
        %425 = vmatprep.mubr.f32.mxu0 0.0
        %426 = vmatmul.mubr.f32.gmra.mrb[0].mxu0 %v354
        %v427 = vpop.f32.mrb[0].mxu0
        %v428 = vadd.f32 0.0, %v427
        %v429 = vpop.f32.mrb[0].mxu0
        %430 = vdwg.mxu0
        %v431 = vadd.f32 %v343, %v423
        %v432 = vadd.f32 %v344, %v428
        %v433 = vld [vmem:[#allocation2 + $0x2] sm:$0xff]
        %v434 = vld [vmem:[#allocation2 + $0xa] sm:$0xff]
        %s435 = scalar_lea.vmem [#allocation5], 32
        %v436 = vld [vmem:[%s435] sm:$0xff]
        %v437 = vld [vmem:[%s435 + $0x8] sm:$0xff]
        %v439 = vsel %vm213, %v433, 0
        %v442 = vsel %vm213, %v434, 0
        %444 = vmatprep.subr.mxu0 0.0
        %445 = vmatpush1.msra.mxu0 %v436
        %446 = vmatprep.subr.mxu0 0.0
        %447 = vmatpush1.msra.mxu0 %v437
        %448 = vmatprep.subr.mxu0 0.0
        %449 = vmatpush1.msra.mxu0 0.0
        %450 = vmatprep.subr.mxu0 0.0
        %451 = vmatpush1.msra.mxu0 0.0
        %452 = vmatprep.subr.mxu0 0.0
        %453 = vmatpush1.msra.mxu0 0.0
        %454 = vmatprep.subr.mxu0 0.0
        %455 = vmatpush1.msra.mxu0 0.0
        %456 = vmatprep.subr.mxu0 0.0
        %457 = vmatpush1.msra.mxu0 0.0
        %458 = vmatprep.subr.mxu0 0.0
        %459 = vmatpush1.msra.mxu0 0.0
        %460 = vmatprep.subr.mxu0 0.0
        %461 = vmatpush1.msra.mxu0 0.0
        %462 = vmatprep.subr.mxu0 0.0
        %463 = vmatpush1.msra.mxu0 0.0
        %464 = vmatprep.subr.mxu0 0.0
        %465 = vmatpush1.msra.mxu0 0.0
        %466 = vmatprep.subr.mxu0 0.0
        %467 = vmatpush1.msra.mxu0 0.0
        %468 = vmatprep.subr.mxu0 0.0
        %469 = vmatpush1.msra.mxu0 0.0
        %470 = vmatprep.subr.mxu0 0.0
        %471 = vmatpush1.msra.mxu0 0.0
        %472 = vmatprep.subr.mxu0 0.0
        %473 = vmatpush1.msra.mxu0 0.0
        %474 = vmatprep.subr.mxu0 0.0
        %475 = vmatpush1.msra.mxu0 0.0
        %476 = vmatprep.subr.mxu0 0.0
        %477 = vmatpush1.msra.mxu0 0.0
        %478 = vmatprep.subr.mxu0 0.0
        %479 = vmatpush1.msra.mxu0 0.0
        %480 = vmatprep.subr.mxu0 0.0
        %481 = vmatpush1.msra.mxu0 0.0
        %482 = vmatprep.subr.mxu0 0.0
        %483 = vmatpush1.msra.mxu0 0.0
        %484 = vmatprep.subr.mxu0 0.0
        %485 = vmatpush1.msra.mxu0 0.0
        %486 = vmatprep.subr.mxu0 0.0
        %487 = vmatpush1.msra.mxu0 0.0
        %488 = vmatprep.subr.mxu0 0.0
        %489 = vmatpush1.msra.mxu0 0.0
        %490 = vmatprep.subr.mxu0 0.0
        %491 = vmatpush1.msra.mxu0 0.0
        %492 = vmatprep.subr.mxu0 0.0
        %493 = vmatpush1.msra.mxu0 0.0
        %494 = vmatprep.subr.mxu0 0.0
        %495 = vmatpush1.msra.mxu0 0.0
        %496 = vmatprep.subr.mxu0 0.0
        %497 = vmatpush1.msra.mxu0 0.0
        %498 = vmatprep.subr.mxu0 0.0
        %499 = vmatpush1.msra.mxu0 0.0
        %500 = vmatprep.subr.mxu0 0.0
        %501 = vmatpush1.msra.mxu0 0.0
        %502 = vmatprep.subr.mxu0 0.0
        %503 = vmatpush1.msra.mxu0 0.0
        %504 = vmatprep.subr.mxu0 0.0
        %505 = vmatpush1.msra.mxu0 0.0
        %506 = vmatprep.subr.mxu0 0.0
        %507 = vmatpush1.msra.mxu0 0.0
        %508 = vmatprep.mubr.f32.mxu0 0.0
        %509 = vmatmul.mubr.f32.gmra.mrb[0].mxu0 %v439
        %v510 = vpop.f32.mrb[0].mxu0
        %v511 = vadd.f32 0.0, %v510
        %v512 = vpop.f32.mrb[0].mxu0
        %513 = vmatprep.mubr.f32.mxu0 0.0
        %514 = vmatmul.mubr.f32.gmra.mrb[0].mxu0 %v442
        %v515 = vpop.f32.mrb[0].mxu0
        %v516 = vadd.f32 0.0, %v515
        %v517 = vpop.f32.mrb[0].mxu0
        %518 = vdwg.mxu0
        %v519 = vadd.f32 %v431, %v511
        %v520 = vadd.f32 %v432, %v516
        %v521 = vld [vmem:[#allocation2 + $0x3] sm:$0xff]
        %v522 = vld [vmem:[#allocation2 + $0xb] sm:$0xff]
        %s523 = scalar_lea.vmem [#allocation5], 48
        %v524 = vld [vmem:[%s523] sm:$0xff]
        %v525 = vld [vmem:[%s523 + $0x8] sm:$0xff]
        %v527 = vsel %vm213, %v521, 0
        %v530 = vsel %vm213, %v522, 0
        %532 = vmatprep.subr.mxu0 0.0
        %533 = vmatpush1.msra.mxu0 %v524
        %534 = vmatprep.subr.mxu0 0.0
        %535 = vmatpush1.msra.mxu0 %v525
        %536 = vmatprep.subr.mxu0 0.0
        %537 = vmatpush1.msra.mxu0 0.0
        %538 = vmatprep.subr.mxu0 0.0
        %539 = vmatpush1.msra.mxu0 0.0
        %540 = vmatprep.subr.mxu0 0.0
        %541 = vmatpush1.msra.mxu0 0.0
        %542 = vmatprep.subr.mxu0 0.0
        %543 = vmatpush1.msra.mxu0 0.0
        %544 = vmatprep.subr.mxu0 0.0
        %545 = vmatpush1.msra.mxu0 0.0
        %546 = vmatprep.subr.mxu0 0.0
        %547 = vmatpush1.msra.mxu0 0.0
        %548 = vmatprep.subr.mxu0 0.0
        %549 = vmatpush1.msra.mxu0 0.0
        %550 = vmatprep.subr.mxu0 0.0
        %551 = vmatpush1.msra.mxu0 0.0
        %552 = vmatprep.subr.mxu0 0.0
        %553 = vmatpush1.msra.mxu0 0.0
        %554 = vmatprep.subr.mxu0 0.0
        %555 = vmatpush1.msra.mxu0 0.0
        %556 = vmatprep.subr.mxu0 0.0
        %557 = vmatpush1.msra.mxu0 0.0
        %558 = vmatprep.subr.mxu0 0.0
        %559 = vmatpush1.msra.mxu0 0.0
        %560 = vmatprep.subr.mxu0 0.0
        %561 = vmatpush1.msra.mxu0 0.0
        %562 = vmatprep.subr.mxu0 0.0
        %563 = vmatpush1.msra.mxu0 0.0
        %564 = vmatprep.subr.mxu0 0.0
        %565 = vmatpush1.msra.mxu0 0.0
        %566 = vmatprep.subr.mxu0 0.0
        %567 = vmatpush1.msra.mxu0 0.0
        %568 = vmatprep.subr.mxu0 0.0
        %569 = vmatpush1.msra.mxu0 0.0
        %570 = vmatprep.subr.mxu0 0.0
        %571 = vmatpush1.msra.mxu0 0.0
        %572 = vmatprep.subr.mxu0 0.0
        %573 = vmatpush1.msra.mxu0 0.0
        %574 = vmatprep.subr.mxu0 0.0
        %575 = vmatpush1.msra.mxu0 0.0
        %576 = vmatprep.subr.mxu0 0.0
        %577 = vmatpush1.msra.mxu0 0.0
        %578 = vmatprep.subr.mxu0 0.0
        %579 = vmatpush1.msra.mxu0 0.0
        %580 = vmatprep.subr.mxu0 0.0
        %581 = vmatpush1.msra.mxu0 0.0
        %582 = vmatprep.subr.mxu0 0.0
        %583 = vmatpush1.msra.mxu0 0.0
        %584 = vmatprep.subr.mxu0 0.0
        %585 = vmatpush1.msra.mxu0 0.0
        %586 = vmatprep.subr.mxu0 0.0
        %587 = vmatpush1.msra.mxu0 0.0
        %588 = vmatprep.subr.mxu0 0.0
        %589 = vmatpush1.msra.mxu0 0.0
        %590 = vmatprep.subr.mxu0 0.0
        %591 = vmatpush1.msra.mxu0 0.0
        %592 = vmatprep.subr.mxu0 0.0
        %593 = vmatpush1.msra.mxu0 0.0
        %594 = vmatprep.subr.mxu0 0.0
        %595 = vmatpush1.msra.mxu0 0.0
        %596 = vmatprep.mubr.f32.mxu0 0.0
        %597 = vmatmul.mubr.f32.gmra.mrb[0].mxu0 %v527
        %v598 = vpop.f32.mrb[0].mxu0
        %v599 = vadd.f32 0.0, %v598
        %v600 = vpop.f32.mrb[0].mxu0
        %601 = vmatprep.mubr.f32.mxu0 0.0
        %602 = vmatmul.mubr.f32.gmra.mrb[0].mxu0 %v530
        %v603 = vpop.f32.mrb[0].mxu0
        %v604 = vadd.f32 0.0, %v603
        %v605 = vpop.f32.mrb[0].mxu0
        %606 = vdwg.mxu0
        %v607 = vadd.f32 %v519, %v599
        %v608 = vadd.f32 %v520, %v604
        %v609 = vld [vmem:[#allocation2 + $0x4] sm:$0xff]
        %v610 = vld [vmem:[#allocation2 + $0xc] sm:$0xff]
        %s611 = scalar_lea.vmem [#allocation5], 64
        %v612 = vld [vmem:[%s611] sm:$0xff]
        %v613 = vld [vmem:[%s611 + $0x8] sm:$0xff]
        %v615 = vsel %vm213, %v609, 0
        %v618 = vsel %vm213, %v610, 0
        %620 = vmatprep.subr.mxu0 0.0
        %621 = vmatpush1.msra.mxu0 %v612
        %622 = vmatprep.subr.mxu0 0.0
        %623 = vmatpush1.msra.mxu0 %v613
        %624 = vmatprep.subr.mxu0 0.0
        %625 = vmatpush1.msra.mxu0 0.0
        %626 = vmatprep.subr.mxu0 0.0
        %627 = vmatpush1.msra.mxu0 0.0
        %628 = vmatprep.subr.mxu0 0.0
        %629 = vmatpush1.msra.mxu0 0.0
        %630 = vmatprep.subr.mxu0 0.0
        %631 = vmatpush1.msra.mxu0 0.0
        %632 = vmatprep.subr.mxu0 0.0
        %633 = vmatpush1.msra.mxu0 0.0
        %634 = vmatprep.subr.mxu0 0.0
        %635 = vmatpush1.msra.mxu0 0.0
        %636 = vmatprep.subr.mxu0 0.0
        %637 = vmatpush1.msra.mxu0 0.0
        %638 = vmatprep.subr.mxu0 0.0
        %639 = vmatpush1.msra.mxu0 0.0
        %640 = vmatprep.subr.mxu0 0.0
        %641 = vmatpush1.msra.mxu0 0.0
        %642 = vmatprep.subr.mxu0 0.0
        %643 = vmatpush1.msra.mxu0 0.0
        %644 = vmatprep.subr.mxu0 0.0
        %645 = vmatpush1.msra.mxu0 0.0
        %646 = vmatprep.subr.mxu0 0.0
        %647 = vmatpush1.msra.mxu0 0.0
        %648 = vmatprep.subr.mxu0 0.0
        %649 = vmatpush1.msra.mxu0 0.0
        %650 = vmatprep.subr.mxu0 0.0
        %651 = vmatpush1.msra.mxu0 0.0
        %652 = vmatprep.subr.mxu0 0.0
        %653 = vmatpush1.msra.mxu0 0.0
        %654 = vmatprep.subr.mxu0 0.0
        %655 = vmatpush1.msra.mxu0 0.0
        %656 = vmatprep.subr.mxu0 0.0
        %657 = vmatpush1.msra.mxu0 0.0
        %658 = vmatprep.subr.mxu0 0.0
        %659 = vmatpush1.msra.mxu0 0.0
        %660 = vmatprep.subr.mxu0 0.0
        %661 = vmatpush1.msra.mxu0 0.0
        %662 = vmatprep.subr.mxu0 0.0
        %663 = vmatpush1.msra.mxu0 0.0
        %664 = vmatprep.subr.mxu0 0.0
        %665 = vmatpush1.msra.mxu0 0.0
        %666 = vmatprep.subr.mxu0 0.0
        %667 = vmatpush1.msra.mxu0 0.0
        %668 = vmatprep.subr.mxu0 0.0
        %669 = vmatpush1.msra.mxu0 0.0
        %670 = vmatprep.subr.mxu0 0.0
        %671 = vmatpush1.msra.mxu0 0.0
        %672 = vmatprep.subr.mxu0 0.0
        %673 = vmatpush1.msra.mxu0 0.0
        %674 = vmatprep.subr.mxu0 0.0
        %675 = vmatpush1.msra.mxu0 0.0
        %676 = vmatprep.subr.mxu0 0.0
        %677 = vmatpush1.msra.mxu0 0.0
        %678 = vmatprep.subr.mxu0 0.0
        %679 = vmatpush1.msra.mxu0 0.0
        %680 = vmatprep.subr.mxu0 0.0
        %681 = vmatpush1.msra.mxu0 0.0
        %682 = vmatprep.subr.mxu0 0.0
        %683 = vmatpush1.msra.mxu0 0.0
        %684 = vmatprep.mubr.f32.mxu0 0.0
        %685 = vmatmul.mubr.f32.gmra.mrb[0].mxu0 %v615
        %v686 = vpop.f32.mrb[0].mxu0
        %v687 = vadd.f32 0.0, %v686
        %v688 = vpop.f32.mrb[0].mxu0
        %689 = vmatprep.mubr.f32.mxu0 0.0
        %690 = vmatmul.mubr.f32.gmra.mrb[0].mxu0 %v618
        %v691 = vpop.f32.mrb[0].mxu0
        %v692 = vadd.f32 0.0, %v691
        %v693 = vpop.f32.mrb[0].mxu0
        %694 = vdwg.mxu0
        %v695 = vadd.f32 %v607, %v687
        %v696 = vadd.f32 %v608, %v692
        %v697 = vld [vmem:[#allocation2 + $0x5] sm:$0xff]
        %v698 = vld [vmem:[#allocation2 + $0xd] sm:$0xff]
        %s699 = scalar_lea.vmem [#allocation5], 80
        %v700 = vld [vmem:[%s699] sm:$0xff]
        %v701 = vld [vmem:[%s699 + $0x8] sm:$0xff]
        %v703 = vsel %vm213, %v697, 0
        %v706 = vsel %vm213, %v698, 0
        %708 = vmatprep.subr.mxu0 0.0
        %709 = vmatpush1.msra.mxu0 %v700
        %710 = vmatprep.subr.mxu0 0.0
        %711 = vmatpush1.msra.mxu0 %v701
        %712 = vmatprep.subr.mxu0 0.0
        %713 = vmatpush1.msra.mxu0 0.0
        %714 = vmatprep.subr.mxu0 0.0
        %715 = vmatpush1.msra.mxu0 0.0
        %716 = vmatprep.subr.mxu0 0.0
        %717 = vmatpush1.msra.mxu0 0.0
        %718 = vmatprep.subr.mxu0 0.0
        %719 = vmatpush1.msra.mxu0 0.0
        %720 = vmatprep.subr.mxu0 0.0
        %721 = vmatpush1.msra.mxu0 0.0
        %722 = vmatprep.subr.mxu0 0.0
        %723 = vmatpush1.msra.mxu0 0.0
        %724 = vmatprep.subr.mxu0 0.0
        %725 = vmatpush1.msra.mxu0 0.0
        %726 = vmatprep.subr.mxu0 0.0
        %727 = vmatpush1.msra.mxu0 0.0
        %728 = vmatprep.subr.mxu0 0.0
        %729 = vmatpush1.msra.mxu0 0.0
        %730 = vmatprep.subr.mxu0 0.0
        %731 = vmatpush1.msra.mxu0 0.0
        %732 = vmatprep.subr.mxu0 0.0
        %733 = vmatpush1.msra.mxu0 0.0
        %734 = vmatprep.subr.mxu0 0.0
        %735 = vmatpush1.msra.mxu0 0.0
        %736 = vmatprep.subr.mxu0 0.0
        %737 = vmatpush1.msra.mxu0 0.0
        %738 = vmatprep.subr.mxu0 0.0
        %739 = vmatpush1.msra.mxu0 0.0
        %740 = vmatprep.subr.mxu0 0.0
        %741 = vmatpush1.msra.mxu0 0.0
        %742 = vmatprep.subr.mxu0 0.0
        %743 = vmatpush1.msra.mxu0 0.0
        %744 = vmatprep.subr.mxu0 0.0
        %745 = vmatpush1.msra.mxu0 0.0
        %746 = vmatprep.subr.mxu0 0.0
        %747 = vmatpush1.msra.mxu0 0.0
        %748 = vmatprep.subr.mxu0 0.0
        %749 = vmatpush1.msra.mxu0 0.0
        %750 = vmatprep.subr.mxu0 0.0
        %751 = vmatpush1.msra.mxu0 0.0
        %752 = vmatprep.subr.mxu0 0.0
        %753 = vmatpush1.msra.mxu0 0.0
        %754 = vmatprep.subr.mxu0 0.0
        %755 = vmatpush1.msra.mxu0 0.0
        %756 = vmatprep.subr.mxu0 0.0
        %757 = vmatpush1.msra.mxu0 0.0
        %758 = vmatprep.subr.mxu0 0.0
        %759 = vmatpush1.msra.mxu0 0.0
        %760 = vmatprep.subr.mxu0 0.0
        %761 = vmatpush1.msra.mxu0 0.0
        %762 = vmatprep.subr.mxu0 0.0
        %763 = vmatpush1.msra.mxu0 0.0
        %764 = vmatprep.subr.mxu0 0.0
        %765 = vmatpush1.msra.mxu0 0.0
        %766 = vmatprep.subr.mxu0 0.0
        %767 = vmatpush1.msra.mxu0 0.0
        %768 = vmatprep.subr.mxu0 0.0
        %769 = vmatpush1.msra.mxu0 0.0
        %770 = vmatprep.subr.mxu0 0.0
        %771 = vmatpush1.msra.mxu0 0.0
        %772 = vmatprep.mubr.f32.mxu0 0.0
        %773 = vmatmul.mubr.f32.gmra.mrb[0].mxu0 %v703
        %v774 = vpop.f32.mrb[0].mxu0
        %v775 = vadd.f32 0.0, %v774
        %v776 = vpop.f32.mrb[0].mxu0
        %777 = vmatprep.mubr.f32.mxu0 0.0
        %778 = vmatmul.mubr.f32.gmra.mrb[0].mxu0 %v706
        %v779 = vpop.f32.mrb[0].mxu0
        %v780 = vadd.f32 0.0, %v779
        %v781 = vpop.f32.mrb[0].mxu0
        %782 = vdwg.mxu0
        %v783 = vadd.f32 %v695, %v775
        %v784 = vadd.f32 %v696, %v780
        %v785 = vld [vmem:[#allocation2 + $0x6] sm:$0xff]
        %v786 = vld [vmem:[#allocation2 + $0xe] sm:$0xff]
        %s787 = scalar_lea.vmem [#allocation5], 96
        %v788 = vld [vmem:[%s787] sm:$0xff]
        %v789 = vld [vmem:[%s787 + $0x8] sm:$0xff]
        %v791 = vsel %vm213, %v785, 0
        %v794 = vsel %vm213, %v786, 0
        %796 = vmatprep.subr.mxu0 0.0
        %797 = vmatpush1.msra.mxu0 %v788
        %798 = vmatprep.subr.mxu0 0.0
        %799 = vmatpush1.msra.mxu0 %v789
        %800 = vmatprep.subr.mxu0 0.0
        %801 = vmatpush1.msra.mxu0 0.0
        %802 = vmatprep.subr.mxu0 0.0
        %803 = vmatpush1.msra.mxu0 0.0
        %804 = vmatprep.subr.mxu0 0.0
        %805 = vmatpush1.msra.mxu0 0.0
        %806 = vmatprep.subr.mxu0 0.0
        %807 = vmatpush1.msra.mxu0 0.0
        %808 = vmatprep.subr.mxu0 0.0
        %809 = vmatpush1.msra.mxu0 0.0
        %810 = vmatprep.subr.mxu0 0.0
        %811 = vmatpush1.msra.mxu0 0.0
        %812 = vmatprep.subr.mxu0 0.0
        %813 = vmatpush1.msra.mxu0 0.0
        %814 = vmatprep.subr.mxu0 0.0
        %815 = vmatpush1.msra.mxu0 0.0
        %816 = vmatprep.subr.mxu0 0.0
        %817 = vmatpush1.msra.mxu0 0.0
        %818 = vmatprep.subr.mxu0 0.0
        %819 = vmatpush1.msra.mxu0 0.0
        %820 = vmatprep.subr.mxu0 0.0
        %821 = vmatpush1.msra.mxu0 0.0
        %822 = vmatprep.subr.mxu0 0.0
        %823 = vmatpush1.msra.mxu0 0.0
        %824 = vmatprep.subr.mxu0 0.0
        %825 = vmatpush1.msra.mxu0 0.0
        %826 = vmatprep.subr.mxu0 0.0
        %827 = vmatpush1.msra.mxu0 0.0
        %828 = vmatprep.subr.mxu0 0.0
        %829 = vmatpush1.msra.mxu0 0.0
        %830 = vmatprep.subr.mxu0 0.0
        %831 = vmatpush1.msra.mxu0 0.0
        %832 = vmatprep.subr.mxu0 0.0
        %833 = vmatpush1.msra.mxu0 0.0
        %834 = vmatprep.subr.mxu0 0.0
        %835 = vmatpush1.msra.mxu0 0.0
        %836 = vmatprep.subr.mxu0 0.0
        %837 = vmatpush1.msra.mxu0 0.0
        %838 = vmatprep.subr.mxu0 0.0
        %839 = vmatpush1.msra.mxu0 0.0
        %840 = vmatprep.subr.mxu0 0.0
        %841 = vmatpush1.msra.mxu0 0.0
        %842 = vmatprep.subr.mxu0 0.0
        %843 = vmatpush1.msra.mxu0 0.0
        %844 = vmatprep.subr.mxu0 0.0
        %845 = vmatpush1.msra.mxu0 0.0
        %846 = vmatprep.subr.mxu0 0.0
        %847 = vmatpush1.msra.mxu0 0.0
        %848 = vmatprep.subr.mxu0 0.0
        %849 = vmatpush1.msra.mxu0 0.0
        %850 = vmatprep.subr.mxu0 0.0
        %851 = vmatpush1.msra.mxu0 0.0
        %852 = vmatprep.subr.mxu0 0.0
        %853 = vmatpush1.msra.mxu0 0.0
        %854 = vmatprep.subr.mxu0 0.0
        %855 = vmatpush1.msra.mxu0 0.0
        %856 = vmatprep.subr.mxu0 0.0
        %857 = vmatpush1.msra.mxu0 0.0
        %858 = vmatprep.subr.mxu0 0.0
        %859 = vmatpush1.msra.mxu0 0.0
        %860 = vmatprep.mubr.f32.mxu0 0.0
        %861 = vmatmul.mubr.f32.gmra.mrb[0].mxu0 %v791
        %v862 = vpop.f32.mrb[0].mxu0
        %v863 = vadd.f32 0.0, %v862
        %v864 = vpop.f32.mrb[0].mxu0
        %865 = vmatprep.mubr.f32.mxu0 0.0
        %866 = vmatmul.mubr.f32.gmra.mrb[0].mxu0 %v794
        %v867 = vpop.f32.mrb[0].mxu0
        %v868 = vadd.f32 0.0, %v867
        %v869 = vpop.f32.mrb[0].mxu0
        %870 = vdwg.mxu0
        %v871 = vadd.f32 %v783, %v863
        %v872 = vadd.f32 %v784, %v868
        %v873 = vld [vmem:[#allocation3] sm:$0xff]
        %v874 = vld [vmem:[#allocation3 + $0x8] sm:$0xff]
        %s875 = scalar_lea.vmem [#allocation5], 112
        %v876 = vld [vmem:[%s875] sm:$0xff]
        %v877 = vld [vmem:[%s875 + $0x8] sm:$0xff]
        %v879 = vsel %vm213, %v873, 0
        %v882 = vsel %vm213, %v874, 0
        %884 = vmatprep.subr.mxu0 0.0
        %885 = vmatpush1.msra.mxu0 %v876
        %886 = vmatprep.subr.mxu0 0.0
        %887 = vmatpush1.msra.mxu0 %v877
        %888 = vmatprep.subr.mxu0 0.0
        %889 = vmatpush1.msra.mxu0 0.0
        %890 = vmatprep.subr.mxu0 0.0
        %891 = vmatpush1.msra.mxu0 0.0
        %892 = vmatprep.subr.mxu0 0.0
        %893 = vmatpush1.msra.mxu0 0.0
        %894 = vmatprep.subr.mxu0 0.0
        %895 = vmatpush1.msra.mxu0 0.0
        %896 = vmatprep.subr.mxu0 0.0
        %897 = vmatpush1.msra.mxu0 0.0
        %898 = vmatprep.subr.mxu0 0.0
        %899 = vmatpush1.msra.mxu0 0.0
        %900 = vmatprep.subr.mxu0 0.0
        %901 = vmatpush1.msra.mxu0 0.0
        %902 = vmatprep.subr.mxu0 0.0
        %903 = vmatpush1.msra.mxu0 0.0
        %904 = vmatprep.subr.mxu0 0.0
        %905 = vmatpush1.msra.mxu0 0.0
        %906 = vmatprep.subr.mxu0 0.0
        %907 = vmatpush1.msra.mxu0 0.0
        %908 = vmatprep.subr.mxu0 0.0
        %909 = vmatpush1.msra.mxu0 0.0
        %910 = vmatprep.subr.mxu0 0.0
        %911 = vmatpush1.msra.mxu0 0.0
        %912 = vmatprep.subr.mxu0 0.0
        %913 = vmatpush1.msra.mxu0 0.0
        %914 = vmatprep.subr.mxu0 0.0
        %915 = vmatpush1.msra.mxu0 0.0
        %916 = vmatprep.subr.mxu0 0.0
        %917 = vmatpush1.msra.mxu0 0.0
        %918 = vmatprep.subr.mxu0 0.0
        %919 = vmatpush1.msra.mxu0 0.0
        %920 = vmatprep.subr.mxu0 0.0
        %921 = vmatpush1.msra.mxu0 0.0
        %922 = vmatprep.subr.mxu0 0.0
        %923 = vmatpush1.msra.mxu0 0.0
        %924 = vmatprep.subr.mxu0 0.0
        %925 = vmatpush1.msra.mxu0 0.0
        %926 = vmatprep.subr.mxu0 0.0
        %927 = vmatpush1.msra.mxu0 0.0
        %928 = vmatprep.subr.mxu0 0.0
        %929 = vmatpush1.msra.mxu0 0.0
        %930 = vmatprep.subr.mxu0 0.0
        %931 = vmatpush1.msra.mxu0 0.0
        %932 = vmatprep.subr.mxu0 0.0
        %933 = vmatpush1.msra.mxu0 0.0
        %934 = vmatprep.subr.mxu0 0.0
        %935 = vmatpush1.msra.mxu0 0.0
        %936 = vmatprep.subr.mxu0 0.0
        %937 = vmatpush1.msra.mxu0 0.0
        %938 = vmatprep.subr.mxu0 0.0
        %939 = vmatpush1.msra.mxu0 0.0
        %940 = vmatprep.subr.mxu0 0.0
        %941 = vmatpush1.msra.mxu0 0.0
        %942 = vmatprep.subr.mxu0 0.0
        %943 = vmatpush1.msra.mxu0 0.0
        %944 = vmatprep.subr.mxu0 0.0
        %945 = vmatpush1.msra.mxu0 0.0
        %946 = vmatprep.subr.mxu0 0.0
        %947 = vmatpush1.msra.mxu0 0.0
        %948 = vmatprep.mubr.f32.mxu0 0.0
        %949 = vmatmul.mubr.f32.gmra.mrb[0].mxu0 %v879
        %v950 = vpop.f32.mrb[0].mxu0
        %v951 = vadd.f32 0.0, %v950
        %v952 = vpop.f32.mrb[0].mxu0
        %953 = vmatprep.mubr.f32.mxu0 0.0
        %954 = vmatmul.mubr.f32.gmra.mrb[0].mxu0 %v882
        %v955 = vpop.f32.mrb[0].mxu0
        %v956 = vadd.f32 0.0, %v955
        %v957 = vpop.f32.mrb[0].mxu0
        %958 = vdwg.mxu0
        %v959 = vadd.f32 %v871, %v951
        %v960 = vadd.f32 %v872, %v956
        %v961 = vld [vmem:[#allocation3 + $0x1] sm:$0xff]
        %v962 = vld [vmem:[#allocation3 + $0x9] sm:$0xff]
        %s963 = scalar_lea.vmem [#allocation5], 128
        %v964 = vld [vmem:[%s963] sm:$0xff]
        %v965 = vld [vmem:[%s963 + $0x8] sm:$0xff]
        %v967 = vsel %vm213, %v961, 0
        %v970 = vsel %vm213, %v962, 0
        %972 = vmatprep.subr.mxu0 0.0
        %973 = vmatpush1.msra.mxu0 %v964
        %974 = vmatprep.subr.mxu0 0.0
        %975 = vmatpush1.msra.mxu0 %v965
        %976 = vmatprep.subr.mxu0 0.0
        %977 = vmatpush1.msra.mxu0 0.0
        %978 = vmatprep.subr.mxu0 0.0
        %979 = vmatpush1.msra.mxu0 0.0
        %980 = vmatprep.subr.mxu0 0.0
        %981 = vmatpush1.msra.mxu0 0.0
        %982 = vmatprep.subr.mxu0 0.0
        %983 = vmatpush1.msra.mxu0 0.0
        %984 = vmatprep.subr.mxu0 0.0
        %985 = vmatpush1.msra.mxu0 0.0
        %986 = vmatprep.subr.mxu0 0.0
        %987 = vmatpush1.msra.mxu0 0.0
        %988 = vmatprep.subr.mxu0 0.0
        %989 = vmatpush1.msra.mxu0 0.0
        %990 = vmatprep.subr.mxu0 0.0
        %991 = vmatpush1.msra.mxu0 0.0
        %992 = vmatprep.subr.mxu0 0.0
        %993 = vmatpush1.msra.mxu0 0.0
        %994 = vmatprep.subr.mxu0 0.0
        %995 = vmatpush1.msra.mxu0 0.0
        %996 = vmatprep.subr.mxu0 0.0
        %997 = vmatpush1.msra.mxu0 0.0
        %998 = vmatprep.subr.mxu0 0.0
        %999 = vmatpush1.msra.mxu0 0.0
        %1000 = vmatprep.subr.mxu0 0.0
        %1001 = vmatpush1.msra.mxu0 0.0
        %1002 = vmatprep.subr.mxu0 0.0
        %1003 = vmatpush1.msra.mxu0 0.0
        %1004 = vmatprep.subr.mxu0 0.0
        %1005 = vmatpush1.msra.mxu0 0.0
        %1006 = vmatprep.subr.mxu0 0.0
        %1007 = vmatpush1.msra.mxu0 0.0
        %1008 = vmatprep.subr.mxu0 0.0
        %1009 = vmatpush1.msra.mxu0 0.0
        %1010 = vmatprep.subr.mxu0 0.0
        %1011 = vmatpush1.msra.mxu0 0.0
        %1012 = vmatprep.subr.mxu0 0.0
        %1013 = vmatpush1.msra.mxu0 0.0
        %1014 = vmatprep.subr.mxu0 0.0
        %1015 = vmatpush1.msra.mxu0 0.0
        %1016 = vmatprep.subr.mxu0 0.0
        %1017 = vmatpush1.msra.mxu0 0.0
        %1018 = vmatprep.subr.mxu0 0.0
        %1019 = vmatpush1.msra.mxu0 0.0
        %1020 = vmatprep.subr.mxu0 0.0
        %1021 = vmatpush1.msra.mxu0 0.0
        %1022 = vmatprep.subr.mxu0 0.0
        %1023 = vmatpush1.msra.mxu0 0.0
        %1024 = vmatprep.subr.mxu0 0.0
        %1025 = vmatpush1.msra.mxu0 0.0
        %1026 = vmatprep.subr.mxu0 0.0
        %1027 = vmatpush1.msra.mxu0 0.0
        %1028 = vmatprep.subr.mxu0 0.0
        %1029 = vmatpush1.msra.mxu0 0.0
        %1030 = vmatprep.subr.mxu0 0.0
        %1031 = vmatpush1.msra.mxu0 0.0
        %1032 = vmatprep.subr.mxu0 0.0
        %1033 = vmatpush1.msra.mxu0 0.0
        %1034 = vmatprep.subr.mxu0 0.0
        %1035 = vmatpush1.msra.mxu0 0.0
        %1036 = vmatprep.mubr.f32.mxu0 0.0
        %1037 = vmatmul.mubr.f32.gmra.mrb[0].mxu0 %v967
        %v1038 = vpop.f32.mrb[0].mxu0
        %v1039 = vadd.f32 0.0, %v1038
        %v1040 = vpop.f32.mrb[0].mxu0
        %1041 = vmatprep.mubr.f32.mxu0 0.0
        %1042 = vmatmul.mubr.f32.gmra.mrb[0].mxu0 %v970
        %v1043 = vpop.f32.mrb[0].mxu0
        %v1044 = vadd.f32 0.0, %v1043
        %v1045 = vpop.f32.mrb[0].mxu0
        %1046 = vdwg.mxu0
        %v1047 = vadd.f32 %v959, %v1039
        %v1048 = vadd.f32 %v960, %v1044
        %v1049 = vld [vmem:[#allocation3 + $0x2] sm:$0xff]
        %v1050 = vld [vmem:[#allocation3 + $0xa] sm:$0xff]
        %s1051 = scalar_lea.vmem [#allocation5], 144
        %v1052 = vld [vmem:[%s1051] sm:$0xff]
        %v1053 = vld [vmem:[%s1051 + $0x8] sm:$0xff]
        %v1055 = vsel %vm213, %v1049, 0
        %v1058 = vsel %vm213, %v1050, 0
        %1060 = vmatprep.subr.mxu0 0.0
        %1061 = vmatpush1.msra.mxu0 %v1052
        %1062 = vmatprep.subr.mxu0 0.0
        %1063 = vmatpush1.msra.mxu0 %v1053
        %1064 = vmatprep.subr.mxu0 0.0
        %1065 = vmatpush1.msra.mxu0 0.0
        %1066 = vmatprep.subr.mxu0 0.0
        %1067 = vmatpush1.msra.mxu0 0.0
        %1068 = vmatprep.subr.mxu0 0.0
        %1069 = vmatpush1.msra.mxu0 0.0
        %1070 = vmatprep.subr.mxu0 0.0
        %1071 = vmatpush1.msra.mxu0 0.0
        %1072 = vmatprep.subr.mxu0 0.0
        %1073 = vmatpush1.msra.mxu0 0.0
        %1074 = vmatprep.subr.mxu0 0.0
        %1075 = vmatpush1.msra.mxu0 0.0
        %1076 = vmatprep.subr.mxu0 0.0
        %1077 = vmatpush1.msra.mxu0 0.0
        %1078 = vmatprep.subr.mxu0 0.0
        %1079 = vmatpush1.msra.mxu0 0.0
        %1080 = vmatprep.subr.mxu0 0.0
        %1081 = vmatpush1.msra.mxu0 0.0
        %1082 = vmatprep.subr.mxu0 0.0
        %1083 = vmatpush1.msra.mxu0 0.0
        %1084 = vmatprep.subr.mxu0 0.0
        %1085 = vmatpush1.msra.mxu0 0.0
        %1086 = vmatprep.subr.mxu0 0.0
        %1087 = vmatpush1.msra.mxu0 0.0
        %1088 = vmatprep.subr.mxu0 0.0
        %1089 = vmatpush1.msra.mxu0 0.0
        %1090 = vmatprep.subr.mxu0 0.0
        %1091 = vmatpush1.msra.mxu0 0.0
        %1092 = vmatprep.subr.mxu0 0.0
        %1093 = vmatpush1.msra.mxu0 0.0
        %1094 = vmatprep.subr.mxu0 0.0
        %1095 = vmatpush1.msra.mxu0 0.0
        %1096 = vmatprep.subr.mxu0 0.0
        %1097 = vmatpush1.msra.mxu0 0.0
        %1098 = vmatprep.subr.mxu0 0.0
        %1099 = vmatpush1.msra.mxu0 0.0
        %1100 = vmatprep.subr.mxu0 0.0
        %1101 = vmatpush1.msra.mxu0 0.0
        %1102 = vmatprep.subr.mxu0 0.0
        %1103 = vmatpush1.msra.mxu0 0.0
        %1104 = vmatprep.subr.mxu0 0.0
        %1105 = vmatpush1.msra.mxu0 0.0
        %1106 = vmatprep.subr.mxu0 0.0
        %1107 = vmatpush1.msra.mxu0 0.0
        %1108 = vmatprep.subr.mxu0 0.0
        %1109 = vmatpush1.msra.mxu0 0.0
        %1110 = vmatprep.subr.mxu0 0.0
        %1111 = vmatpush1.msra.mxu0 0.0
        %1112 = vmatprep.subr.mxu0 0.0
        %1113 = vmatpush1.msra.mxu0 0.0
        %1114 = vmatprep.subr.mxu0 0.0
        %1115 = vmatpush1.msra.mxu0 0.0
        %1116 = vmatprep.subr.mxu0 0.0
        %1117 = vmatpush1.msra.mxu0 0.0
        %1118 = vmatprep.subr.mxu0 0.0
        %1119 = vmatpush1.msra.mxu0 0.0
        %1120 = vmatprep.subr.mxu0 0.0
        %1121 = vmatpush1.msra.mxu0 0.0
        %1122 = vmatprep.subr.mxu0 0.0
        %1123 = vmatpush1.msra.mxu0 0.0
        %1124 = vmatprep.mubr.f32.mxu0 0.0
        %1125 = vmatmul.mubr.f32.gmra.mrb[0].mxu0 %v1055
        %v1126 = vpop.f32.mrb[0].mxu0
        %v1127 = vadd.f32 0.0, %v1126
        %v1128 = vpop.f32.mrb[0].mxu0
        %1129 = vmatprep.mubr.f32.mxu0 0.0
        %1130 = vmatmul.mubr.f32.gmra.mrb[0].mxu0 %v1058
        %v1131 = vpop.f32.mrb[0].mxu0
        %v1132 = vadd.f32 0.0, %v1131
        %v1133 = vpop.f32.mrb[0].mxu0
        %1134 = vdwg.mxu0
        %v1135 = vadd.f32 %v1047, %v1127
        %v1136 = vadd.f32 %v1048, %v1132
        %v1137 = vld [vmem:[#allocation3 + $0x3] sm:$0xff]
        %v1138 = vld [vmem:[#allocation3 + $0xb] sm:$0xff]
        %s1139 = scalar_lea.vmem [#allocation5], 160
        %v1140 = vld [vmem:[%s1139] sm:$0xff]
        %v1141 = vld [vmem:[%s1139 + $0x8] sm:$0xff]
        %v1143 = vsel %vm213, %v1137, 0
        %v1146 = vsel %vm213, %v1138, 0
        %1148 = vmatprep.subr.mxu0 0.0
        %1149 = vmatpush1.msra.mxu0 %v1140
        %1150 = vmatprep.subr.mxu0 0.0
        %1151 = vmatpush1.msra.mxu0 %v1141
        %1152 = vmatprep.subr.mxu0 0.0
        %1153 = vmatpush1.msra.mxu0 0.0
        %1154 = vmatprep.subr.mxu0 0.0
        %1155 = vmatpush1.msra.mxu0 0.0
        %1156 = vmatprep.subr.mxu0 0.0
        %1157 = vmatpush1.msra.mxu0 0.0
        %1158 = vmatprep.subr.mxu0 0.0
        %1159 = vmatpush1.msra.mxu0 0.0
        %1160 = vmatprep.subr.mxu0 0.0
        %1161 = vmatpush1.msra.mxu0 0.0
        %1162 = vmatprep.subr.mxu0 0.0
        %1163 = vmatpush1.msra.mxu0 0.0
        %1164 = vmatprep.subr.mxu0 0.0
        %1165 = vmatpush1.msra.mxu0 0.0
        %1166 = vmatprep.subr.mxu0 0.0
        %1167 = vmatpush1.msra.mxu0 0.0
        %1168 = vmatprep.subr.mxu0 0.0
        %1169 = vmatpush1.msra.mxu0 0.0
        %1170 = vmatprep.subr.mxu0 0.0
        %1171 = vmatpush1.msra.mxu0 0.0
        %1172 = vmatprep.subr.mxu0 0.0
        %1173 = vmatpush1.msra.mxu0 0.0
        %1174 = vmatprep.subr.mxu0 0.0
        %1175 = vmatpush1.msra.mxu0 0.0
        %1176 = vmatprep.subr.mxu0 0.0
        %1177 = vmatpush1.msra.mxu0 0.0
        %1178 = vmatprep.subr.mxu0 0.0
        %1179 = vmatpush1.msra.mxu0 0.0
        %1180 = vmatprep.subr.mxu0 0.0
        %1181 = vmatpush1.msra.mxu0 0.0
        %1182 = vmatprep.subr.mxu0 0.0
        %1183 = vmatpush1.msra.mxu0 0.0
        %1184 = vmatprep.subr.mxu0 0.0
        %1185 = vmatpush1.msra.mxu0 0.0
        %1186 = vmatprep.subr.mxu0 0.0
        %1187 = vmatpush1.msra.mxu0 0.0
        %1188 = vmatprep.subr.mxu0 0.0
        %1189 = vmatpush1.msra.mxu0 0.0
        %1190 = vmatprep.subr.mxu0 0.0
        %1191 = vmatpush1.msra.mxu0 0.0
        %1192 = vmatprep.subr.mxu0 0.0
        %1193 = vmatpush1.msra.mxu0 0.0
        %1194 = vmatprep.subr.mxu0 0.0
        %1195 = vmatpush1.msra.mxu0 0.0
        %1196 = vmatprep.subr.mxu0 0.0
        %1197 = vmatpush1.msra.mxu0 0.0
        %1198 = vmatprep.subr.mxu0 0.0
        %1199 = vmatpush1.msra.mxu0 0.0
        %1200 = vmatprep.subr.mxu0 0.0
        %1201 = vmatpush1.msra.mxu0 0.0
        %1202 = vmatprep.subr.mxu0 0.0
        %1203 = vmatpush1.msra.mxu0 0.0
        %1204 = vmatprep.subr.mxu0 0.0
        %1205 = vmatpush1.msra.mxu0 0.0
        %1206 = vmatprep.subr.mxu0 0.0
        %1207 = vmatpush1.msra.mxu0 0.0
        %1208 = vmatprep.subr.mxu0 0.0
        %1209 = vmatpush1.msra.mxu0 0.0
        %1210 = vmatprep.subr.mxu0 0.0
        %1211 = vmatpush1.msra.mxu0 0.0
        %1212 = vmatprep.mubr.f32.mxu0 0.0
        %1213 = vmatmul.mubr.f32.gmra.mrb[0].mxu0 %v1143
        %v1214 = vpop.f32.mrb[0].mxu0
        %v1215 = vadd.f32 0.0, %v1214
        %v1216 = vpop.f32.mrb[0].mxu0
        %1217 = vmatprep.mubr.f32.mxu0 0.0
        %1218 = vmatmul.mubr.f32.gmra.mrb[0].mxu0 %v1146
        %v1219 = vpop.f32.mrb[0].mxu0
        %v1220 = vadd.f32 0.0, %v1219
        %v1221 = vpop.f32.mrb[0].mxu0
        %1222 = vdwg.mxu0
        %v1223 = vadd.f32 %v1135, %v1215
        %v1224 = vadd.f32 %v1136, %v1220
        %v1225 = vld [vmem:[#allocation3 + $0x4] sm:$0xff]
        %v1226 = vld [vmem:[#allocation3 + $0xc] sm:$0xff]
        %s1227 = scalar_lea.vmem [#allocation5], 176
        %v1228 = vld [vmem:[%s1227] sm:$0xff]
        %v1229 = vld [vmem:[%s1227 + $0x8] sm:$0xff]
        %v1231 = vsel %vm213, %v1225, 0
        %v1234 = vsel %vm213, %v1226, 0
        %1236 = vmatprep.subr.mxu0 0.0
        %1237 = vmatpush1.msra.mxu0 %v1228
        %1238 = vmatprep.subr.mxu0 0.0
        %1239 = vmatpush1.msra.mxu0 %v1229
        %1240 = vmatprep.subr.mxu0 0.0
        %1241 = vmatpush1.msra.mxu0 0.0
        %1242 = vmatprep.subr.mxu0 0.0
        %1243 = vmatpush1.msra.mxu0 0.0
        %1244 = vmatprep.subr.mxu0 0.0
        %1245 = vmatpush1.msra.mxu0 0.0
        %1246 = vmatprep.subr.mxu0 0.0
        %1247 = vmatpush1.msra.mxu0 0.0
        %1248 = vmatprep.subr.mxu0 0.0
        %1249 = vmatpush1.msra.mxu0 0.0
        %1250 = vmatprep.subr.mxu0 0.0
        %1251 = vmatpush1.msra.mxu0 0.0
        %1252 = vmatprep.subr.mxu0 0.0
        %1253 = vmatpush1.msra.mxu0 0.0
        %1254 = vmatprep.subr.mxu0 0.0
        %1255 = vmatpush1.msra.mxu0 0.0
        %1256 = vmatprep.subr.mxu0 0.0
        %1257 = vmatpush1.msra.mxu0 0.0
        %1258 = vmatprep.subr.mxu0 0.0
        %1259 = vmatpush1.msra.mxu0 0.0
        %1260 = vmatprep.subr.mxu0 0.0
        %1261 = vmatpush1.msra.mxu0 0.0
        %1262 = vmatprep.subr.mxu0 0.0
        %1263 = vmatpush1.msra.mxu0 0.0
        %1264 = vmatprep.subr.mxu0 0.0
        %1265 = vmatpush1.msra.mxu0 0.0
        %1266 = vmatprep.subr.mxu0 0.0
        %1267 = vmatpush1.msra.mxu0 0.0
        %1268 = vmatprep.subr.mxu0 0.0
        %1269 = vmatpush1.msra.mxu0 0.0
        %1270 = vmatprep.subr.mxu0 0.0
        %1271 = vmatpush1.msra.mxu0 0.0
        %1272 = vmatprep.subr.mxu0 0.0
        %1273 = vmatpush1.msra.mxu0 0.0
        %1274 = vmatprep.subr.mxu0 0.0
        %1275 = vmatpush1.msra.mxu0 0.0
        %1276 = vmatprep.subr.mxu0 0.0
        %1277 = vmatpush1.msra.mxu0 0.0
        %1278 = vmatprep.subr.mxu0 0.0
        %1279 = vmatpush1.msra.mxu0 0.0
        %1280 = vmatprep.subr.mxu0 0.0
        %1281 = vmatpush1.msra.mxu0 0.0
        %1282 = vmatprep.subr.mxu0 0.0
        %1283 = vmatpush1.msra.mxu0 0.0
        %1284 = vmatprep.subr.mxu0 0.0
        %1285 = vmatpush1.msra.mxu0 0.0
        %1286 = vmatprep.subr.mxu0 0.0
        %1287 = vmatpush1.msra.mxu0 0.0
        %1288 = vmatprep.subr.mxu0 0.0
        %1289 = vmatpush1.msra.mxu0 0.0
        %1290 = vmatprep.subr.mxu0 0.0
        %1291 = vmatpush1.msra.mxu0 0.0
        %1292 = vmatprep.subr.mxu0 0.0
        %1293 = vmatpush1.msra.mxu0 0.0
        %1294 = vmatprep.subr.mxu0 0.0
        %1295 = vmatpush1.msra.mxu0 0.0
        %1296 = vmatprep.subr.mxu0 0.0
        %1297 = vmatpush1.msra.mxu0 0.0
        %1298 = vmatprep.subr.mxu0 0.0
        %1299 = vmatpush1.msra.mxu0 0.0
        %1300 = vmatprep.mubr.f32.mxu0 0.0
        %1301 = vmatmul.mubr.f32.gmra.mrb[0].mxu0 %v1231
        %v1302 = vpop.f32.mrb[0].mxu0
        %v1303 = vadd.f32 0.0, %v1302
        %v1304 = vpop.f32.mrb[0].mxu0
        %1305 = vmatprep.mubr.f32.mxu0 0.0
        %1306 = vmatmul.mubr.f32.gmra.mrb[0].mxu0 %v1234
        %v1307 = vpop.f32.mrb[0].mxu0
        %v1308 = vadd.f32 0.0, %v1307
        %v1309 = vpop.f32.mrb[0].mxu0
        %1310 = vdwg.mxu0
        %v1311 = vadd.f32 %v1223, %v1303
        %v1312 = vadd.f32 %v1224, %v1308
        %v1313 = vld [vmem:[#allocation3 + $0x5] sm:$0xff]
        %v1314 = vld [vmem:[#allocation3 + $0xd] sm:$0xff]
        %s1315 = scalar_lea.vmem [#allocation5], 192
        %v1316 = vld [vmem:[%s1315] sm:$0xff]
        %v1317 = vld [vmem:[%s1315 + $0x8] sm:$0xff]
        %v1319 = vsel %vm213, %v1313, 0
        %v1322 = vsel %vm213, %v1314, 0
        %1324 = vmatprep.subr.mxu0 0.0
        %1325 = vmatpush1.msra.mxu0 %v1316
        %1326 = vmatprep.subr.mxu0 0.0
        %1327 = vmatpush1.msra.mxu0 %v1317
        %1328 = vmatprep.subr.mxu0 0.0
        %1329 = vmatpush1.msra.mxu0 0.0
        %1330 = vmatprep.subr.mxu0 0.0
        %1331 = vmatpush1.msra.mxu0 0.0
        %1332 = vmatprep.subr.mxu0 0.0
        %1333 = vmatpush1.msra.mxu0 0.0
        %1334 = vmatprep.subr.mxu0 0.0
        %1335 = vmatpush1.msra.mxu0 0.0
        %1336 = vmatprep.subr.mxu0 0.0
        %1337 = vmatpush1.msra.mxu0 0.0
        %1338 = vmatprep.subr.mxu0 0.0
        %1339 = vmatpush1.msra.mxu0 0.0
        %1340 = vmatprep.subr.mxu0 0.0
        %1341 = vmatpush1.msra.mxu0 0.0
        %1342 = vmatprep.subr.mxu0 0.0
        %1343 = vmatpush1.msra.mxu0 0.0
        %1344 = vmatprep.subr.mxu0 0.0
        %1345 = vmatpush1.msra.mxu0 0.0
        %1346 = vmatprep.subr.mxu0 0.0
        %1347 = vmatpush1.msra.mxu0 0.0
        %1348 = vmatprep.subr.mxu0 0.0
        %1349 = vmatpush1.msra.mxu0 0.0
        %1350 = vmatprep.subr.mxu0 0.0
        %1351 = vmatpush1.msra.mxu0 0.0
        %1352 = vmatprep.subr.mxu0 0.0
        %1353 = vmatpush1.msra.mxu0 0.0
        %1354 = vmatprep.subr.mxu0 0.0
        %1355 = vmatpush1.msra.mxu0 0.0
        %1356 = vmatprep.subr.mxu0 0.0
        %1357 = vmatpush1.msra.mxu0 0.0
        %1358 = vmatprep.subr.mxu0 0.0
        %1359 = vmatpush1.msra.mxu0 0.0
        %1360 = vmatprep.subr.mxu0 0.0
        %1361 = vmatpush1.msra.mxu0 0.0
        %1362 = vmatprep.subr.mxu0 0.0
        %1363 = vmatpush1.msra.mxu0 0.0
        %1364 = vmatprep.subr.mxu0 0.0
        %1365 = vmatpush1.msra.mxu0 0.0
        %1366 = vmatprep.subr.mxu0 0.0
        %1367 = vmatpush1.msra.mxu0 0.0
        %1368 = vmatprep.subr.mxu0 0.0
        %1369 = vmatpush1.msra.mxu0 0.0
        %1370 = vmatprep.subr.mxu0 0.0
        %1371 = vmatpush1.msra.mxu0 0.0
        %1372 = vmatprep.subr.mxu0 0.0
        %1373 = vmatpush1.msra.mxu0 0.0
        %1374 = vmatprep.subr.mxu0 0.0
        %1375 = vmatpush1.msra.mxu0 0.0
        %1376 = vmatprep.subr.mxu0 0.0
        %1377 = vmatpush1.msra.mxu0 0.0
        %1378 = vmatprep.subr.mxu0 0.0
        %1379 = vmatpush1.msra.mxu0 0.0
        %1380 = vmatprep.subr.mxu0 0.0
        %1381 = vmatpush1.msra.mxu0 0.0
        %1382 = vmatprep.subr.mxu0 0.0
        %1383 = vmatpush1.msra.mxu0 0.0
        %1384 = vmatprep.subr.mxu0 0.0
        %1385 = vmatpush1.msra.mxu0 0.0
        %1386 = vmatprep.subr.mxu0 0.0
        %1387 = vmatpush1.msra.mxu0 0.0
        %1388 = vmatprep.mubr.f32.mxu0 0.0
        %1389 = vmatmul.mubr.f32.gmra.mrb[0].mxu0 %v1319
        %v1390 = vpop.f32.mrb[0].mxu0
        %v1391 = vadd.f32 0.0, %v1390
        %v1392 = vpop.f32.mrb[0].mxu0
        %1393 = vmatprep.mubr.f32.mxu0 0.0
        %1394 = vmatmul.mubr.f32.gmra.mrb[0].mxu0 %v1322
        %v1395 = vpop.f32.mrb[0].mxu0
        %v1396 = vadd.f32 0.0, %v1395
        %v1397 = vpop.f32.mrb[0].mxu0
        %1398 = vdwg.mxu0
        %v1399 = vadd.f32 %v1311, %v1391
        %v1400 = vadd.f32 %v1312, %v1396
        %v1401 = vld [vmem:[#allocation3 + $0x6] sm:$0xff]
        %v1402 = vld [vmem:[#allocation3 + $0xe] sm:$0xff]
        %s1403 = scalar_lea.vmem [#allocation5], 208
        %v1404 = vld [vmem:[%s1403] sm:$0xff]
        %v1405 = vld [vmem:[%s1403 + $0x8] sm:$0xff]
        %v1407 = vsel %vm213, %v1401, 0
        %v1410 = vsel %vm213, %v1402, 0
        %1412 = vmatprep.subr.mxu0 0.0
        %1413 = vmatpush1.msra.mxu0 %v1404
        %1414 = vmatprep.subr.mxu0 0.0
        %1415 = vmatpush1.msra.mxu0 %v1405
        %1416 = vmatprep.subr.mxu0 0.0
        %1417 = vmatpush1.msra.mxu0 0.0
        %1418 = vmatprep.subr.mxu0 0.0
        %1419 = vmatpush1.msra.mxu0 0.0
        %1420 = vmatprep.subr.mxu0 0.0
        %1421 = vmatpush1.msra.mxu0 0.0
        %1422 = vmatprep.subr.mxu0 0.0
        %1423 = vmatpush1.msra.mxu0 0.0
        %1424 = vmatprep.subr.mxu0 0.0
        %1425 = vmatpush1.msra.mxu0 0.0
        %1426 = vmatprep.subr.mxu0 0.0
        %1427 = vmatpush1.msra.mxu0 0.0
        %1428 = vmatprep.subr.mxu0 0.0
        %1429 = vmatpush1.msra.mxu0 0.0
        %1430 = vmatprep.subr.mxu0 0.0
        %1431 = vmatpush1.msra.mxu0 0.0
        %1432 = vmatprep.subr.mxu0 0.0
        %1433 = vmatpush1.msra.mxu0 0.0
        %1434 = vmatprep.subr.mxu0 0.0
        %1435 = vmatpush1.msra.mxu0 0.0
        %1436 = vmatprep.subr.mxu0 0.0
        %1437 = vmatpush1.msra.mxu0 0.0
        %1438 = vmatprep.subr.mxu0 0.0
        %1439 = vmatpush1.msra.mxu0 0.0
        %1440 = vmatprep.subr.mxu0 0.0
        %1441 = vmatpush1.msra.mxu0 0.0
        %1442 = vmatprep.subr.mxu0 0.0
        %1443 = vmatpush1.msra.mxu0 0.0
        %1444 = vmatprep.subr.mxu0 0.0
        %1445 = vmatpush1.msra.mxu0 0.0
        %1446 = vmatprep.subr.mxu0 0.0
        %1447 = vmatpush1.msra.mxu0 0.0
        %1448 = vmatprep.subr.mxu0 0.0
        %1449 = vmatpush1.msra.mxu0 0.0
        %1450 = vmatprep.subr.mxu0 0.0
        %1451 = vmatpush1.msra.mxu0 0.0
        %1452 = vmatprep.subr.mxu0 0.0
        %1453 = vmatpush1.msra.mxu0 0.0
        %1454 = vmatprep.subr.mxu0 0.0
        %1455 = vmatpush1.msra.mxu0 0.0
        %1456 = vmatprep.subr.mxu0 0.0
        %1457 = vmatpush1.msra.mxu0 0.0
        %1458 = vmatprep.subr.mxu0 0.0
        %1459 = vmatpush1.msra.mxu0 0.0
        %1460 = vmatprep.subr.mxu0 0.0
        %1461 = vmatpush1.msra.mxu0 0.0
        %1462 = vmatprep.subr.mxu0 0.0
        %1463 = vmatpush1.msra.mxu0 0.0
        %1464 = vmatprep.subr.mxu0 0.0
        %1465 = vmatpush1.msra.mxu0 0.0
        %1466 = vmatprep.subr.mxu0 0.0
        %1467 = vmatpush1.msra.mxu0 0.0
        %1468 = vmatprep.subr.mxu0 0.0
        %1469 = vmatpush1.msra.mxu0 0.0
        %1470 = vmatprep.subr.mxu0 0.0
        %1471 = vmatpush1.msra.mxu0 0.0
        %1472 = vmatprep.subr.mxu0 0.0
        %1473 = vmatpush1.msra.mxu0 0.0
        %1474 = vmatprep.subr.mxu0 0.0
        %1475 = vmatpush1.msra.mxu0 0.0
        %1476 = vmatprep.mubr.f32.mxu0 0.0
        %1477 = vmatmul.mubr.f32.gmra.mrb[0].mxu0 %v1407
        %v1478 = vpop.f32.mrb[0].mxu0
        %v1479 = vadd.f32 0.0, %v1478
        %v1480 = vpop.f32.mrb[0].mxu0
        %1481 = vmatprep.mubr.f32.mxu0 0.0
        %1482 = vmatmul.mubr.f32.gmra.mrb[0].mxu0 %v1410
        %v1483 = vpop.f32.mrb[0].mxu0
        %v1484 = vadd.f32 0.0, %v1483
        %v1485 = vpop.f32.mrb[0].mxu0
        %1486 = vdwg.mxu0
        %v1487 = vadd.f32 %v1399, %v1479
        %v1488 = vadd.f32 %v1400, %v1484
        %v1489 = vxor.u32 %v1487, 2147483648
        %v1490 = vxor.u32 %v1488, 2147483648
        %v1491 = vmul.f32 %v1489, 1.442695
        %v1492 = vpow.pop %v1491
        %v1493 = vmul.f32 %v1490, 1.442695
        %v1494 = vpow.pop %v1493
        %v1495 = vadd.f32 %v1492, 1.0
        %v1496 = vadd.f32 %v1494, 1.0
        %v1497 = vrcp.pop %v1495
        %v1498 = vmul.f32 1.0, %v1497
        %v1499 = vrcp.pop %v1496
        %v1500 = vmul.f32 1.0, %v1499
        %1501 = vst.msk [vmem:[%s204] sm:$0xff] %vm213, %v1498
        %1502 = vst.msk [vmem:[%s204 + $0x8] sm:$0xff] %vm213, %v1500
        %s1503 = sand.u32 %s98, 1
        %s1504 = scalar_lea.sflag [#allocation7], %s1503
        %s1505 = sand.u32 %s98, 1
        %s1506 = smul.addr %s1505, 16
        %s1507 = scalar_lea.vmem [#allocation10], %s1506
        // Predicated region
        $region41: #{tpu_custom_call.1} parent=31 // pred_check
          %p1508 = pneg %p108
        $region42: #{tpu_custom_call.1} parent=31 // pred_check_branch
          %1510 = sbr.rel (%p1508) target = $region44
        $region43: #{tpu_custom_call.1} parent=31 // pred_region
          %s1512 = ssub.s32 256, 256
          %1513 = vsyncadd %s1504, %s1512
          %s1514 = smul.addr %s22, 2
          %s1515 = smul.addr %s1514, 128
          %s1516 = scalar_lea.hbm %s3, %s1515
          %s1517 = sshll.u32 %s1507, 4
          %s1518 = int_to_ptr.vmem [resolvable:$true] %s1517
          %1523 = dma.vmem_to_hbm [thread:$0]  %s1518, 256, %s1516, %s1504, 128, 128, 8
        $region44: #{tpu_custom_call.1} parent=31 // pred_fallthru
          _
      $region32: #{tpu_custom_call.1} parent=5 // pred_fallthru
        _
      %p1524 = scmp.le.s32.totalorder 2, %s17
      // Predicated region
      $region45: #{tpu_custom_call.1} parent=5 // pred_check
        %p1525 = pneg %p1524
      $region46: #{tpu_custom_call.1} parent=5 // pred_check_branch
        %1527 = sbr.rel (%p1525) target = $region48
      $region47: #{tpu_custom_call.1} parent=5 // pred_region
        %s1528 = ssub.s32 %s17, 2
        // Predicated region
        $region49: #{tpu_custom_call.1} parent=47 // pred_check
          %p1529 = pneg %p114
        $region50: #{tpu_custom_call.1} parent=47 // pred_check_branch
          %1531 = sbr.rel (%p1529) target = $region52
        $region51: #{tpu_custom_call.1} parent=47 // pred_region
          %s1532 = sand.u32 %s99, 1
          %s1533 = scalar_lea.sflag [#allocation7], %s1532
          %s1534 = sand.u32 %s99, 1
          %s1535 = smul.addr %s1534, 16
          %s1536 = scalar_lea.vmem [#allocation10], %s1535
          %1537 = dma.done %s1533, 256
        $region52: #{tpu_custom_call.1} parent=47 // pred_fallthru
          _
      $region48: #{tpu_custom_call.1} parent=5 // pred_fallthru
        _
    $region6: #{tpu_custom_call.1} parent=1 // loop_footer
      %s21 = sadd.s32 1, %s17
    $region7: #{tpu_custom_call.1} parent=1 // loop_footer_branch
      %16 = sbr.rel target = $region3
    $region8: #{tpu_custom_call.1} parent=1 // loop_exit
      _
    %1538 = vsyncpa [#allocation6], 1
    %s1539 = scalar_lea.sflag [#allocation6], 1
    %1540 = vsyncpa %s1539, 1
    %1541 = vsyncpa [#allocation9], 1
    %s1542 = scalar_lea.sflag [#allocation9], 1
    %1543 = vsyncpa %s1542, 1
    %1544 = vsyncpa [#allocation7], 1
    %s1545 = scalar_lea.sflag [#allocation7], 1
    %1546 = vsyncpa %s1545, 1

</llo_original>
